<compile_context>
chip_gen: v6e
topology: v6e:2x2x1
jax: 0.10.0
libtpu: 0.0.40
codegen_flags: <defaults>
</compile_context>

<pallas_src>
import functools
import math

import jax
import jax.numpy as jnp
from jax.experimental import pallas as pl
from jax.experimental.pallas import tpu as pltpu

MXU_DTYPE = jnp.bfloat16
LN_EPS = 1e-5


# ----------------------------- helpers -----------------------------

def _pick_tile(dim, candidates):
    for c in candidates:
        if dim >= c and dim % c == 0:
            return c
    return dim


def _layernorm(y, gamma, beta, eps):
    mean = jnp.mean(y, axis=-1, keepdims=True)
    yc = y - mean
    var = jnp.mean(yc * yc, axis=-1, keepdims=True)
    return yc * jax.lax.rsqrt(var + eps) * gamma + beta


# ----------------------------- Pallas kernels -----------------------------

def _attn_block_kernel(x_ref, s_ref, wq_ref, bq_ref, wkv_ref, bkv_ref,
                       wo_ref, bo_ref, g_ref, be_ref, bias_ref, o_ref,
                       *, n_head, eps):
    """Fused attention block for one batch element:
       q/k/v projection -> per-head softmax attention -> out-proj -> +residual -> LayerNorm."""
    x = x_ref[0]                         # (Sq, D)  f32
    src = s_ref[0]                       # (Sk, D)  f32  (kv source)
    bias = bias_ref[0]                   # (Sq, Sk) f32  additive mask bias
    d = x.shape[-1]
    dh = d // n_head
    scale = 1.0 / math.sqrt(dh)

    xb = x.astype(MXU_DTYPE)
    sb = src.astype(MXU_DTYPE)

    q = jnp.dot(xb, wq_ref[...], preferred_element_type=jnp.float32) + bq_ref[...]     # (Sq, D)
    kv = jnp.dot(sb, wkv_ref[...], preferred_element_type=jnp.float32) + bkv_ref[...]  # (Sk, 2D)
    k = kv[:, :d]
    v = kv[:, d:]

    qb = q.astype(MXU_DTYPE)
    kb = k.astype(MXU_DTYPE)
    vb = v.astype(MXU_DTYPE)
    wo = wo_ref[...]                     # (D, D) bf16

    dn = (((1,), (1,)), ((), ()))        # contract last dims, no batch dims (q @ k^T w/o transpose)
    acc = jnp.zeros_like(x)              # (Sq, D) f32 accumulated attn-out @ Wo
    for h in range(n_head):              # static unroll over heads; all data stays in vregs/VMEM
        lo = h * dh
        qh = qb[:, lo:lo + dh]
        kh = kb[:, lo:lo + dh]
        vh = vb[:, lo:lo + dh]
        s = jax.lax.dot_general(qh, kh, dn, preferred_element_type=jnp.float32)
        s = s * scale + bias
        s = s - jnp.max(s, axis=-1, keepdims=True)
        p = jnp.exp(s)
        p = p * pl.reciprocal(jnp.sum(p, axis=-1, keepdims=True), approx=True)
        oh = jnp.dot(p.astype(MXU_DTYPE), vh, preferred_element_type=jnp.float32)        # (Sq, dh)
        acc = acc + jnp.dot(oh.astype(MXU_DTYPE), wo[lo:lo + dh, :],
                            preferred_element_type=jnp.float32)                          # (Sq, D)

    y = acc + bo_ref[...] + x            # out-proj bias + residual (f32)
    o_ref[0] = _layernorm(y, g_ref[...], be_ref[...], eps)


def _ffn_block_kernel(x_ref, w1_ref, b1_ref, w2_ref, b2_ref, g_ref, be_ref, o_ref, *, eps):
    """Fused position-wise FFN: matmul -> ReLU -> matmul -> +residual -> LayerNorm."""
    x = x_ref[...]                                                                       # (tm, D)
    h = jnp.dot(x.astype(MXU_DTYPE), w1_ref[...], preferred_element_type=jnp.float32) + b1_ref[...]
    h = jnp.maximum(h, 0.0)
    y = jnp.dot(h.astype(MXU_DTYPE), w2_ref[...], preferred_element_type=jnp.float32) + b2_ref[...] + x
    o_ref[...] = _layernorm(y, g_ref[...], be_ref[...], eps)


def _linear_kernel(x_ref, w_ref, b_ref, o_ref):
    y = jnp.dot(x_ref[...].astype(MXU_DTYPE), w_ref[...],
                preferred_element_type=jnp.float32) + b_ref[...]
    o_ref[...] = y


# ----------------------------- kernel wrappers -----------------------------

def attention_block(x, kv_src, bias, wq, bq, wkv, bkv, wo, bo, gamma, beta, n_head,
                    eps=LN_EPS):
    """x: [B,Sq,D], kv_src: [B,Sk,D], bias: [B,Sq,Sk] additive.  Returns [B,Sq,D]."""
    B, Sq, D = x.shape
    Sk = kv_src.shape[1]
    return pl.pallas_call(
        functools.partial(_attn_block_kernel, n_head=n_head, eps=eps),
        out_shape=jax.ShapeDtypeStruct((B, Sq, D), jnp.float32),
        grid=(B,),
        in_specs=[
            pl.BlockSpec((1, Sq, D), lambda b: (b, 0, 0)),       # x (query / residual source)
            pl.BlockSpec((1, Sk, D), lambda b: (b, 0, 0)),       # kv source
            pl.BlockSpec((D, D), lambda b: (0, 0)),              # wq  (resident across grid)
            pl.BlockSpec((1, D), lambda b: (0, 0)),              # bq
            pl.BlockSpec((D, 2 * D), lambda b: (0, 0)),          # fused wk|wv
            pl.BlockSpec((1, 2 * D), lambda b: (0, 0)),          # fused bk|bv
            pl.BlockSpec((D, D), lambda b: (0, 0)),              # wo
            pl.BlockSpec((1, D), lambda b: (0, 0)),              # bo
            pl.BlockSpec((1, D), lambda b: (0, 0)),              # gamma
            pl.BlockSpec((1, D), lambda b: (0, 0)),              # beta
            pl.BlockSpec((1, Sq, Sk), lambda b: (b, 0, 0)),      # additive mask bias
        ],
        out_specs=pl.BlockSpec((1, Sq, D), lambda b: (b, 0, 0)),
        compiler_params=pltpu.CompilerParams(
            dimension_semantics=("parallel",)),
    )(x, kv_src, wq, bq, wkv, bkv, wo, bo, gamma, beta, bias)


def ffn_block(x, w1, b1, w2, b2, gamma, beta, eps=LN_EPS):
    lead = x.shape[:-1]
    d = x.shape[-1]
    dhid = w1.shape[1]
    x2 = x.reshape(-1, d)
    m = x2.shape[0]
    tm = _pick_tile(m, (256, 128, 64, 32, 16, 8))
    out = pl.pallas_call(
        functools.partial(_ffn_block_kernel, eps=eps),
        out_shape=jax.ShapeDtypeStruct((m, d), jnp.float32),
        grid=(m // tm,),
        in_specs=[
            pl.BlockSpec((tm, d), lambda i: (i, 0)),
            pl.BlockSpec((d, dhid), lambda i: (0, 0)),
            pl.BlockSpec((1, dhid), lambda i: (0, 0)),
            pl.BlockSpec((dhid, d), lambda i: (0, 0)),
            pl.BlockSpec((1, d), lambda i: (0, 0)),
            pl.BlockSpec((1, d), lambda i: (0, 0)),
            pl.BlockSpec((1, d), lambda i: (0, 0)),
        ],
        out_specs=pl.BlockSpec((tm, d), lambda i: (i, 0)),
        compiler_params=pltpu.CompilerParams(dimension_semantics=("parallel",)),
    )(x2, w1, b1, w2, b2, gamma, beta)
    return out.reshape(*lead, d)


def linear(x, w, b):
    """Tiled matmul + bias; output last dim must be lane-dense (multiple of 128 or small-full)."""
    lead = x.shape[:-1]
    din, dout = w.shape
    x2 = x.reshape(-1, din)
    m = x2.shape[0]
    tm = _pick_tile(m, (256, 128, 64, 32, 16, 8))
    tn = _pick_tile(dout, (512, 256, 128))
    out = pl.pallas_call(
        _linear_kernel,
        out_shape=jax.ShapeDtypeStruct((m, dout), jnp.float32),
        grid=(m // tm, dout // tn),
        in_specs=[
            pl.BlockSpec((tm, din), lambda i, j: (i, 0)),
            pl.BlockSpec((din, tn), lambda i, j: (0, j)),
            pl.BlockSpec((1, tn), lambda i, j: (0, j)),
        ],
        out_specs=pl.BlockSpec((tm, tn), lambda i, j: (i, j)),
        compiler_params=pltpu.CompilerParams(
            dimension_semantics=("parallel", "parallel")),
    )(x2, w, b)
    return out.reshape(*lead, dout)


# ----------------------------- glue / params -----------------------------

def sinusoidal_pos_encoding(max_len, d):
    pos = jnp.arange(max_len, dtype=jnp.float32)[:, None]
    i = jnp.arange(0, d, 2, dtype=jnp.float32)
    div = jnp.exp(-math.log(10000.0) * i / d)
    pe = jnp.zeros((max_len, d), jnp.float32)
    pe = pe.at[:, 0::2].set(jnp.sin(pos * div))
    pe = pe.at[:, 1::2].set(jnp.cos(pos * div))
    return pe


def _init_linear(key, din, dout, scale=0.02):
    k1, k2 = jax.random.split(key)
    w = (scale * jax.random.normal(k1, (din, dout), jnp.float32)).astype(MXU_DTYPE)
    b = scale * jax.random.normal(k2, (1, dout), jnp.float32)
    return w, b


def init_params(key, vocab_size, dim_vector, max_len, num_layer, dim_hidden):
    keys = jax.random.split(key, 2 + num_layer)
    params = {
        "embed": 0.02 * jax.random.normal(keys[0], (vocab_size, dim_vector), jnp.float32),
        "pos": sinusoidal_pos_encoding(max_len, dim_vector),
        "layers": [],
    }
    for li in range(num_layer):
        lk = jax.random.split(keys[1 + li], 8)
        lp = {}
        # self-attention: separate Q, fused K|V, out-proj
        lp["wq1"], lp["bq1"] = _init_linear(lk[0], dim_vector, dim_vector)
        lp["wkv1"], lp["bkv1"] = _init_linear(lk[1], dim_vector, 2 * dim_vector)
        lp["wo1"], lp["bo1"] = _init_linear(lk[2], dim_vector, dim_vector)
        # cross-attention
        lp["wq2"], lp["bq2"] = _init_linear(lk[3], dim_vector, dim_vector)
        lp["wkv2"], lp["bkv2"] = _init_linear(lk[4], dim_vector, 2 * dim_vector)
        lp["wo2"], lp["bo2"] = _init_linear(lk[5], dim_vector, dim_vector)
        # feed-forward
        lp["w_ff1"], lp["b_ff1"] = _init_linear(lk[6], dim_vector, dim_hidden)
        lp["w_ff2"], lp["b_ff2"] = _init_linear(lk[7], dim_hidden, dim_vector)
        for i in (1, 2, 3):
            lp[f"g{i}"] = jnp.ones((1, dim_vector), jnp.float32)
            lp[f"b{i}"] = jnp.zeros((1, dim_vector), jnp.float32)
        params["layers"].append(lp)
    # final vocab projection, padded to a multiple of 128 lanes (sliced back after the kernel)
    vocab_pad = ((vocab_size + 127) // 128) * 128
    params["w_out"], params["b_out"] = _init_linear(keys[-1], dim_vector, vocab_pad)
    return params


def decoder_forward(params, decoder_input, encoder_output, trg_mask, src_mask,
                    n_head, vocab_size):
    B, S = decoder_input.shape
    Sk = encoder_output.shape[1]

    # TransformerEmbedding: token gather + positional encoding (dropout = identity in eval).
    x = params["embed"][decoder_input] + params["pos"][:S][None, :, :]

    # Convert 1/0 keep-masks to additive f32 biases ONCE; reused across layers and heads
    # (no per-(batch,head) mask DMA, no compare inside the kernels).
    trg_bias = jnp.where(
        jnp.broadcast_to(trg_mask, (B, 1, S, S))[:, 0] == 0, -1e9, 0.0).astype(jnp.float32)
    src_bias = jnp.where(
        jnp.broadcast_to(src_mask, (B, 1, S, Sk))[:, 0] == 0, -1e9, 0.0).astype(jnp.float32)

    for lp in params["layers"]:
        # masked self-attention block (QKV + attn + out-proj + residual + LN fused)
        x = attention_block(x, x, trg_bias,
                            lp["wq1"], lp["bq1"], lp["wkv1"], lp["bkv1"],
                            lp["wo1"], lp["bo1"], lp["g1"], lp["b1"], n_head)
        # encoder-decoder (cross) attention block
        x = attention_block(x, encoder_output, src_bias,
                            lp["wq2"], lp["bq2"], lp["wkv2"], lp["bkv2"],
                            lp["wo2"], lp["bo2"], lp["g2"], lp["b2"], n_head)
        # position-wise feed-forward block (matmul -> ReLU -> matmul -> residual -> LN fused)
        x = ffn_block(x, lp["w_ff1"], lp["b_ff1"], lp["w_ff2"], lp["b_ff2"],
                      lp["g3"], lp["b3"])

    # final projection to (padded) vocabulary, then slice back to true vocab size
    logits = linear(x, params["w_out"], params["b_out"])
    return logits[..., :vocab_size]


if __name__ == "__main__":
    vocab_size = 100
    dim_vector = 32
    max_len = 16
    num_layer = 2
    n_head = 4
    dim_hidden = 64
    B, S_dec, S_enc = 2, 8, 8

    root = jax.random.PRNGKey(0)
    kp, kd, ke = jax.random.split(root, 3)

    params = init_params(kp, vocab_size, dim_vector, max_len, num_layer, dim_hidden)
    decoder_input = jax.random.randint(kd, (B, S_dec), 0, vocab_size)
    encoder_output = jax.random.normal(ke, (B, S_enc, dim_vector), jnp.float32)

    # causal (no-peek) target mask and all-ones source mask, PyTorch convention (1=keep, 0=mask)
    trg_mask = jnp.tril(jnp.ones((S_dec, S_dec), jnp.float32))[None, None]          # [1,1,Sq,Sq]
    trg_mask = jnp.broadcast_to(trg_mask, (B, 1, S_dec, S_dec))
    src_mask = jnp.ones((B, 1, 1, S_enc), jnp.float32)

    out = decoder_forward(params, decoder_input, encoder_output, trg_mask, src_mask,
                          n_head, vocab_size)
    out = jax.block_until_ready(out)

    assert out.shape == (B, S_dec, vocab_size), out.shape
    assert bool(jnp.all(jnp.isfinite(out)))
    print("KERNEL_OK")
</pallas_src>

<mosaic_0001>
module attributes {stable_mosaic.version = 11 : i64} {
  func.func @_attn_block_kernel(%arg0: i32, %arg1: memref<1x8x32xf32, #tpu.memory_space<vmem>>, %arg2: memref<1x8x32xf32, #tpu.memory_space<vmem>>, %arg3: memref<32x32xbf16, #tpu.memory_space<vmem>>, %arg4: memref<1x32xf32, #tpu.memory_space<vmem>>, %arg5: memref<32x64xbf16, #tpu.memory_space<vmem>>, %arg6: memref<1x64xf32, #tpu.memory_space<vmem>>, %arg7: memref<32x32xbf16, #tpu.memory_space<vmem>>, %arg8: memref<1x32xf32, #tpu.memory_space<vmem>>, %arg9: memref<1x32xf32, #tpu.memory_space<vmem>>, %arg10: memref<1x32xf32, #tpu.memory_space<vmem>>, %arg11: memref<1x8x8xf32, #tpu.memory_space<vmem>>, %arg12: memref<1x8x32xf32, #tpu.memory_space<vmem>>) attributes {dimension_semantics = [#tpu.dimension_semantics<parallel>], iteration_bounds = array<i64: 2>, scalar_prefetch = 0 : i64, scratch_operands = 0 : i64, tpu.core_type = #tpu.core_type<tc>, window_params = [{transform_indices = @transform_0, window_bounds = array<i64: 1, 8, 32>}, {transform_indices = @transform_1, window_bounds = array<i64: 1, 8, 32>}, {pipeline_mode = #tpu.pipeline_mode<synchronous>, transform_indices = @transform_2, window_bounds = array<i64: 32, 32>}, {pipeline_mode = #tpu.pipeline_mode<synchronous>, transform_indices = @transform_3, window_bounds = array<i64: 1, 32>}, {pipeline_mode = #tpu.pipeline_mode<synchronous>, transform_indices = @transform_4, window_bounds = array<i64: 32, 64>}, {pipeline_mode = #tpu.pipeline_mode<synchronous>, transform_indices = @transform_5, window_bounds = array<i64: 1, 64>}, {pipeline_mode = #tpu.pipeline_mode<synchronous>, transform_indices = @transform_6, window_bounds = array<i64: 32, 32>}, {pipeline_mode = #tpu.pipeline_mode<synchronous>, transform_indices = @transform_7, window_bounds = array<i64: 1, 32>}, {pipeline_mode = #tpu.pipeline_mode<synchronous>, transform_indices = @transform_8, window_bounds = array<i64: 1, 32>}, {pipeline_mode = #tpu.pipeline_mode<synchronous>, transform_indices = @transform_9, window_bounds = array<i64: 1, 32>}, {transform_indices = @transform_10, window_bounds = array<i64: 1, 8, 8>}, {transform_indices = @transform_11, window_bounds = array<i64: 1, 8, 32>}]} {
    %c0 = arith.constant 0 : index
    %c0_0 = arith.constant 0 : index
    %c0_1 = arith.constant 0 : index
    %0 = vector.load %arg1[%c0, %c0_0, %c0_1] : memref<1x8x32xf32, #tpu.memory_space<vmem>>, vector<1x8x32xf32>
    %1 = vector.shape_cast %0 : vector<1x8x32xf32> to vector<8x32xf32>
    %c0_2 = arith.constant 0 : index
    %c0_3 = arith.constant 0 : index
    %c0_4 = arith.constant 0 : index
    %2 = vector.load %arg2[%c0_2, %c0_3, %c0_4] : memref<1x8x32xf32, #tpu.memory_space<vmem>>, vector<1x8x32xf32>
    %3 = vector.shape_cast %2 : vector<1x8x32xf32> to vector<8x32xf32>
    %c0_5 = arith.constant 0 : index
    %c0_6 = arith.constant 0 : index
    %c0_7 = arith.constant 0 : index
    %4 = vector.load %arg11[%c0_5, %c0_6, %c0_7] : memref<1x8x8xf32, #tpu.memory_space<vmem>>, vector<1x8x8xf32>
    %5 = vector.shape_cast %4 : vector<1x8x8xf32> to vector<8x8xf32>
    %6 = arith.truncf %1 : vector<8x32xf32> to vector<8x32xbf16>
    %7 = arith.truncf %3 : vector<8x32xf32> to vector<8x32xbf16>
    %c0_8 = arith.constant 0 : index
    %c0_9 = arith.constant 0 : index
    %8 = vector.load %arg3[%c0_8, %c0_9] : memref<32x32xbf16, #tpu.memory_space<vmem>>, vector<32x32xbf16>
    %cst = arith.constant dense<0.000000e+00> : vector<8x32xf32>
    %9 = tpu.matmul %6, %8, %cst {dimension_numbers = #tpu.dot_dimension_numbers<[1], [0], [0], [1], [0, 0, 1, 1], [], []>} : vector<8x32xbf16>, vector<32x32xbf16>, vector<8x32xf32> -> vector<8x32xf32>
    %c0_10 = arith.constant 0 : index
    %c0_11 = arith.constant 0 : index
    %10 = vector.load %arg4[%c0_10, %c0_11] : memref<1x32xf32, #tpu.memory_space<vmem>>, vector<1x32xf32>
    %11 = vector.broadcast %10 : vector<1x32xf32> to vector<8x32xf32>
    %12 = arith.addf %9, %11 : vector<8x32xf32>
    %c0_12 = arith.constant 0 : index
    %c0_13 = arith.constant 0 : index
    %13 = vector.load %arg5[%c0_12, %c0_13] : memref<32x64xbf16, #tpu.memory_space<vmem>>, vector<32x64xbf16>
    %cst_14 = arith.constant dense<0.000000e+00> : vector<8x64xf32>
    %14 = tpu.matmul %7, %13, %cst_14 {dimension_numbers = #tpu.dot_dimension_numbers<[1], [0], [0], [1], [0, 0, 1, 1], [], []>} : vector<8x32xbf16>, vector<32x64xbf16>, vector<8x64xf32> -> vector<8x64xf32>
    %c0_15 = arith.constant 0 : index
    %c0_16 = arith.constant 0 : index
    %15 = vector.load %arg6[%c0_15, %c0_16] : memref<1x64xf32, #tpu.memory_space<vmem>>, vector<1x64xf32>
    %16 = vector.broadcast %15 : vector<1x64xf32> to vector<8x64xf32>
    %17 = arith.addf %14, %16 : vector<8x64xf32>
    %18 = vector.extract_strided_slice %17 {offsets = [0, 0], sizes = [8, 32], strides = [1, 1]} : vector<8x64xf32> to vector<8x32xf32>
    %19 = vector.extract_strided_slice %17 {offsets = [0, 32], sizes = [8, 32], strides = [1, 1]} : vector<8x64xf32> to vector<8x32xf32>
    %20 = arith.truncf %12 : vector<8x32xf32> to vector<8x32xbf16>
    %21 = arith.truncf %18 : vector<8x32xf32> to vector<8x32xbf16>
    %22 = arith.truncf %19 : vector<8x32xf32> to vector<8x32xbf16>
    %c0_17 = arith.constant 0 : index
    %c0_18 = arith.constant 0 : index
    %23 = vector.load %arg7[%c0_17, %c0_18] : memref<32x32xbf16, #tpu.memory_space<vmem>>, vector<32x32xbf16>
    %cst_19 = arith.constant 0.000000e+00 : f32
    %24 = vector.broadcast %cst_19 : f32 to vector<8x32xf32>
    %25 = vector.extract_strided_slice %20 {offsets = [0, 0], sizes = [8, 8], strides = [1, 1]} : vector<8x32xbf16> to vector<8x8xbf16>
    %26 = vector.extract_strided_slice %21 {offsets = [0, 0], sizes = [8, 8], strides = [1, 1]} : vector<8x32xbf16> to vector<8x8xbf16>
    %27 = vector.extract_strided_slice %22 {offsets = [0, 0], sizes = [8, 8], strides = [1, 1]} : vector<8x32xbf16> to vector<8x8xbf16>
    %cst_20 = arith.constant dense<0.000000e+00> : vector<8x8xf32>
    %28 = tpu.matmul %25, %26, %cst_20 {dimension_numbers = #tpu.dot_dimension_numbers<[1], [1], [0], [0], [0, 0, 1, 0], [], []>} : vector<8x8xbf16>, vector<8x8xbf16>, vector<8x8xf32> -> vector<8x8xf32>
    %cst_21 = arith.constant 0.353553385 : f32
    %29 = vector.broadcast %cst_21 : f32 to vector<8x8xf32>
    %30 = arith.mulf %28, %29 : vector<8x8xf32>
    %31 = arith.addf %30, %5 : vector<8x8xf32>
    %cst_22 = arith.constant dense<0xFF800000> : vector<8xf32>
    %32 = vector.multi_reduction <maximumf>, %31, %cst_22 [1] : vector<8x8xf32> to vector<8xf32>
    %33 = vector.shape_cast %32 : vector<8xf32> to vector<8x1xf32>
    %34 = vector.broadcast %33 : vector<8x1xf32> to vector<8x8xf32>
    %35 = arith.subf %31, %34 : vector<8x8xf32>
    %36 = math.exp %35 : vector<8x8xf32>
    %cst_23 = arith.constant dense<0.000000e+00> : vector<8xf32>
    %37 = vector.multi_reduction <add>, %36, %cst_23 [1] : vector<8x8xf32> to vector<8xf32>
    %38 = vector.shape_cast %37 : vector<8xf32> to vector<8x1xf32>
    %39 = tpu.reciprocal %38 {approx = true} : vector<8x1xf32> -> vector<8x1xf32>
    %40 = vector.broadcast %39 : vector<8x1xf32> to vector<8x8xf32>
    %41 = arith.mulf %36, %40 : vector<8x8xf32>
    %42 = arith.truncf %41 : vector<8x8xf32> to vector<8x8xbf16>
    %cst_24 = arith.constant dense<0.000000e+00> : vector<8x8xf32>
    %43 = tpu.matmul %42, %27, %cst_24 {dimension_numbers = #tpu.dot_dimension_numbers<[1], [0], [0], [1], [0, 0, 1, 1], [], []>} : vector<8x8xbf16>, vector<8x8xbf16>, vector<8x8xf32> -> vector<8x8xf32>
    %44 = arith.truncf %43 : vector<8x8xf32> to vector<8x8xbf16>
    %45 = vector.extract_strided_slice %23 {offsets = [0, 0], sizes = [8, 32], strides = [1, 1]} : vector<32x32xbf16> to vector<8x32xbf16>
    %cst_25 = arith.constant dense<0.000000e+00> : vector<8x32xf32>
    %46 = tpu.matmul %44, %45, %cst_25 {dimension_numbers = #tpu.dot_dimension_numbers<[1], [0], [0], [1], [0, 0, 1, 1], [], []>} : vector<8x8xbf16>, vector<8x32xbf16>, vector<8x32xf32> -> vector<8x32xf32>
    %47 = arith.addf %24, %46 : vector<8x32xf32>
    %48 = vector.extract_strided_slice %20 {offsets = [0, 8], sizes = [8, 8], strides = [1, 1]} : vector<8x32xbf16> to vector<8x8xbf16>
    %49 = vector.extract_strided_slice %21 {offsets = [0, 8], sizes = [8, 8], strides = [1, 1]} : vector<8x32xbf16> to vector<8x8xbf16>
    %50 = vector.extract_strided_slice %22 {offsets = [0, 8], sizes = [8, 8], strides = [1, 1]} : vector<8x32xbf16> to vector<8x8xbf16>
    %cst_26 = arith.constant dense<0.000000e+00> : vector<8x8xf32>
    %51 = tpu.matmul %48, %49, %cst_26 {dimension_numbers = #tpu.dot_dimension_numbers<[1], [1], [0], [0], [0, 0, 1, 0], [], []>} : vector<8x8xbf16>, vector<8x8xbf16>, vector<8x8xf32> -> vector<8x8xf32>
    %cst_27 = arith.constant 0.353553385 : f32
    %52 = vector.broadcast %cst_27 : f32 to vector<8x8xf32>
    %53 = arith.mulf %51, %52 : vector<8x8xf32>
    %54 = arith.addf %53, %5 : vector<8x8xf32>
    %cst_28 = arith.constant dense<0xFF800000> : vector<8xf32>
    %55 = vector.multi_reduction <maximumf>, %54, %cst_28 [1] : vector<8x8xf32> to vector<8xf32>
    %56 = vector.shape_cast %55 : vector<8xf32> to vector<8x1xf32>
    %57 = vector.broadcast %56 : vector<8x1xf32> to vector<8x8xf32>
    %58 = arith.subf %54, %57 : vector<8x8xf32>
    %59 = math.exp %58 : vector<8x8xf32>
    %cst_29 = arith.constant dense<0.000000e+00> : vector<8xf32>
    %60 = vector.multi_reduction <add>, %59, %cst_29 [1] : vector<8x8xf32> to vector<8xf32>
    %61 = vector.shape_cast %60 : vector<8xf32> to vector<8x1xf32>
    %62 = tpu.reciprocal %61 {approx = true} : vector<8x1xf32> -> vector<8x1xf32>
    %63 = vector.broadcast %62 : vector<8x1xf32> to vector<8x8xf32>
    %64 = arith.mulf %59, %63 : vector<8x8xf32>
    %65 = arith.truncf %64 : vector<8x8xf32> to vector<8x8xbf16>
    %cst_30 = arith.constant dense<0.000000e+00> : vector<8x8xf32>
    %66 = tpu.matmul %65, %50, %cst_30 {dimension_numbers = #tpu.dot_dimension_numbers<[1], [0], [0], [1], [0, 0, 1, 1], [], []>} : vector<8x8xbf16>, vector<8x8xbf16>, vector<8x8xf32> -> vector<8x8xf32>
    %67 = arith.truncf %66 : vector<8x8xf32> to vector<8x8xbf16>
    %68 = vector.extract_strided_slice %23 {offsets = [8, 0], sizes = [8, 32], strides = [1, 1]} : vector<32x32xbf16> to vector<8x32xbf16>
    %cst_31 = arith.constant dense<0.000000e+00> : vector<8x32xf32>
    %69 = tpu.matmul %67, %68, %cst_31 {dimension_numbers = #tpu.dot_dimension_numbers<[1], [0], [0], [1], [0, 0, 1, 1], [], []>} : vector<8x8xbf16>, vector<8x32xbf16>, vector<8x32xf32> -> vector<8x32xf32>
    %70 = arith.addf %47, %69 : vector<8x32xf32>
    %71 = vector.extract_strided_slice %20 {offsets = [0, 16], sizes = [8, 8], strides = [1, 1]} : vector<8x32xbf16> to vector<8x8xbf16>
    %72 = vector.extract_strided_slice %21 {offsets = [0, 16], sizes = [8, 8], strides = [1, 1]} : vector<8x32xbf16> to vector<8x8xbf16>
    %73 = vector.extract_strided_slice %22 {offsets = [0, 16], sizes = [8, 8], strides = [1, 1]} : vector<8x32xbf16> to vector<8x8xbf16>
    %cst_32 = arith.constant dense<0.000000e+00> : vector<8x8xf32>
    %74 = tpu.matmul %71, %72, %cst_32 {dimension_numbers = #tpu.dot_dimension_numbers<[1], [1], [0], [0], [0, 0, 1, 0], [], []>} : vector<8x8xbf16>, vector<8x8xbf16>, vector<8x8xf32> -> vector<8x8xf32>
    %cst_33 = arith.constant 0.353553385 : f32
    %75 = vector.broadcast %cst_33 : f32 to vector<8x8xf32>
    %76 = arith.mulf %74, %75 : vector<8x8xf32>
    %77 = arith.addf %76, %5 : vector<8x8xf32>
    %cst_34 = arith.constant dense<0xFF800000> : vector<8xf32>
    %78 = vector.multi_reduction <maximumf>, %77, %cst_34 [1] : vector<8x8xf32> to vector<8xf32>
    %79 = vector.shape_cast %78 : vector<8xf32> to vector<8x1xf32>
    %80 = vector.broadcast %79 : vector<8x1xf32> to vector<8x8xf32>
    %81 = arith.subf %77, %80 : vector<8x8xf32>
    %82 = math.exp %81 : vector<8x8xf32>
    %cst_35 = arith.constant dense<0.000000e+00> : vector<8xf32>
    %83 = vector.multi_reduction <add>, %82, %cst_35 [1] : vector<8x8xf32> to vector<8xf32>
    %84 = vector.shape_cast %83 : vector<8xf32> to vector<8x1xf32>
    %85 = tpu.reciprocal %84 {approx = true} : vector<8x1xf32> -> vector<8x1xf32>
    %86 = vector.broadcast %85 : vector<8x1xf32> to vector<8x8xf32>
    %87 = arith.mulf %82, %86 : vector<8x8xf32>
    %88 = arith.truncf %87 : vector<8x8xf32> to vector<8x8xbf16>
    %cst_36 = arith.constant dense<0.000000e+00> : vector<8x8xf32>
    %89 = tpu.matmul %88, %73, %cst_36 {dimension_numbers = #tpu.dot_dimension_numbers<[1], [0], [0], [1], [0, 0, 1, 1], [], []>} : vector<8x8xbf16>, vector<8x8xbf16>, vector<8x8xf32> -> vector<8x8xf32>
    %90 = arith.truncf %89 : vector<8x8xf32> to vector<8x8xbf16>
    %91 = vector.extract_strided_slice %23 {offsets = [16, 0], sizes = [8, 32], strides = [1, 1]} : vector<32x32xbf16> to vector<8x32xbf16>
    %cst_37 = arith.constant dense<0.000000e+00> : vector<8x32xf32>
    %92 = tpu.matmul %90, %91, %cst_37 {dimension_numbers = #tpu.dot_dimension_numbers<[1], [0], [0], [1], [0, 0, 1, 1], [], []>} : vector<8x8xbf16>, vector<8x32xbf16>, vector<8x32xf32> -> vector<8x32xf32>
    %93 = arith.addf %70, %92 : vector<8x32xf32>
    %94 = vector.extract_strided_slice %20 {offsets = [0, 24], sizes = [8, 8], strides = [1, 1]} : vector<8x32xbf16> to vector<8x8xbf16>
    %95 = vector.extract_strided_slice %21 {offsets = [0, 24], sizes = [8, 8], strides = [1, 1]} : vector<8x32xbf16> to vector<8x8xbf16>
    %96 = vector.extract_strided_slice %22 {offsets = [0, 24], sizes = [8, 8], strides = [1, 1]} : vector<8x32xbf16> to vector<8x8xbf16>
    %cst_38 = arith.constant dense<0.000000e+00> : vector<8x8xf32>
    %97 = tpu.matmul %94, %95, %cst_38 {dimension_numbers = #tpu.dot_dimension_numbers<[1], [1], [0], [0], [0, 0, 1, 0], [], []>} : vector<8x8xbf16>, vector<8x8xbf16>, vector<8x8xf32> -> vector<8x8xf32>
    %cst_39 = arith.constant 0.353553385 : f32
    %98 = vector.broadcast %cst_39 : f32 to vector<8x8xf32>
    %99 = arith.mulf %97, %98 : vector<8x8xf32>
    %100 = arith.addf %99, %5 : vector<8x8xf32>
    %cst_40 = arith.constant dense<0xFF800000> : vector<8xf32>
    %101 = vector.multi_reduction <maximumf>, %100, %cst_40 [1] : vector<8x8xf32> to vector<8xf32>
    %102 = vector.shape_cast %101 : vector<8xf32> to vector<8x1xf32>
    %103 = vector.broadcast %102 : vector<8x1xf32> to vector<8x8xf32>
    %104 = arith.subf %100, %103 : vector<8x8xf32>
    %105 = math.exp %104 : vector<8x8xf32>
    %cst_41 = arith.constant dense<0.000000e+00> : vector<8xf32>
    %106 = vector.multi_reduction <add>, %105, %cst_41 [1] : vector<8x8xf32> to vector<8xf32>
    %107 = vector.shape_cast %106 : vector<8xf32> to vector<8x1xf32>
    %108 = tpu.reciprocal %107 {approx = true} : vector<8x1xf32> -> vector<8x1xf32>
    %109 = vector.broadcast %108 : vector<8x1xf32> to vector<8x8xf32>
    %110 = arith.mulf %105, %109 : vector<8x8xf32>
    %111 = arith.truncf %110 : vector<8x8xf32> to vector<8x8xbf16>
    %cst_42 = arith.constant dense<0.000000e+00> : vector<8x8xf32>
    %112 = tpu.matmul %111, %96, %cst_42 {dimension_numbers = #tpu.dot_dimension_numbers<[1], [0], [0], [1], [0, 0, 1, 1], [], []>} : vector<8x8xbf16>, vector<8x8xbf16>, vector<8x8xf32> -> vector<8x8xf32>
    %113 = arith.truncf %112 : vector<8x8xf32> to vector<8x8xbf16>
    %114 = vector.extract_strided_slice %23 {offsets = [24, 0], sizes = [8, 32], strides = [1, 1]} : vector<32x32xbf16> to vector<8x32xbf16>
    %cst_43 = arith.constant dense<0.000000e+00> : vector<8x32xf32>
    %115 = tpu.matmul %113, %114, %cst_43 {dimension_numbers = #tpu.dot_dimension_numbers<[1], [0], [0], [1], [0, 0, 1, 1], [], []>} : vector<8x8xbf16>, vector<8x32xbf16>, vector<8x32xf32> -> vector<8x32xf32>
    %116 = arith.addf %93, %115 : vector<8x32xf32>
    %c0_44 = arith.constant 0 : index
    %c0_45 = arith.constant 0 : index
    %117 = vector.load %arg8[%c0_44, %c0_45] : memref<1x32xf32, #tpu.memory_space<vmem>>, vector<1x32xf32>
    %118 = vector.broadcast %117 : vector<1x32xf32> to vector<8x32xf32>
    %119 = arith.addf %116, %118 : vector<8x32xf32>
    %120 = arith.addf %119, %1 : vector<8x32xf32>
    %c0_46 = arith.constant 0 : index
    %c0_47 = arith.constant 0 : index
    %121 = vector.load %arg9[%c0_46, %c0_47] : memref<1x32xf32, #tpu.memory_space<vmem>>, vector<1x32xf32>
    %c0_48 = arith.constant 0 : index
    %c0_49 = arith.constant 0 : index
    %122 = vector.load %arg10[%c0_48, %c0_49] : memref<1x32xf32, #tpu.memory_space<vmem>>, vector<1x32xf32>
    %cst_50 = arith.constant dense<0.000000e+00> : vector<8xf32>
    %123 = vector.multi_reduction <add>, %120, %cst_50 [1] : vector<8x32xf32> to vector<8xf32>
    %124 = vector.shape_cast %123 : vector<8xf32> to vector<8x1xf32>
    %cst_51 = arith.constant 3.200000e+01 : f32
    %125 = vector.broadcast %cst_51 : f32 to vector<8x1xf32>
    %126 = arith.divf %124, %125 : vector<8x1xf32>
    %127 = vector.broadcast %126 : vector<8x1xf32> to vector<8x32xf32>
    %128 = arith.subf %120, %127 : vector<8x32xf32>
    %129 = arith.mulf %128, %128 : vector<8x32xf32>
    %cst_52 = arith.constant dense<0.000000e+00> : vector<8xf32>
    %130 = vector.multi_reduction <add>, %129, %cst_52 [1] : vector<8x32xf32> to vector<8xf32>
    %131 = vector.shape_cast %130 : vector<8xf32> to vector<8x1xf32>
    %cst_53 = arith.constant 3.200000e+01 : f32
    %132 = vector.broadcast %cst_53 : f32 to vector<8x1xf32>
    %133 = arith.divf %131, %132 : vector<8x1xf32>
    %cst_54 = arith.constant 9.99999974E-6 : f32
    %134 = vector.broadcast %cst_54 : f32 to vector<8x1xf32>
    %135 = arith.addf %133, %134 : vector<8x1xf32>
    %136 = math.rsqrt %135 : vector<8x1xf32>
    %137 = vector.broadcast %136 : vector<8x1xf32> to vector<8x32xf32>
    %138 = arith.mulf %128, %137 : vector<8x32xf32>
    %139 = vector.broadcast %121 : vector<1x32xf32> to vector<8x32xf32>
    %140 = arith.mulf %138, %139 : vector<8x32xf32>
    %141 = vector.broadcast %122 : vector<1x32xf32> to vector<8x32xf32>
    %142 = arith.addf %140, %141 : vector<8x32xf32>
    %c0_55 = arith.constant 0 : index
    %c0_56 = arith.constant 0 : index
    %c0_57 = arith.constant 0 : index
    %143 = vector.load %arg12[%c0_55, %c0_56, %c0_57] : memref<1x8x32xf32, #tpu.memory_space<vmem>>, vector<1x8x32xf32>
    %144 = vector.shape_cast %143 : vector<1x8x32xf32> to vector<8x32xf32>
    %145 = vector.shape_cast %142 : vector<8x32xf32> to vector<1x8x32xf32>
    tpu.vector_store %arg12[%c0_55, %c0_56, %c0_57], %145 {strides = array<i32>} : memref<1x8x32xf32, #tpu.memory_space<vmem>>, vector<1x8x32xf32>,
    return
  }
  func.func @transform_0(%arg0: i32) -> (i32, i32, i32) {
    %c0_i32 = arith.constant 0 : i32
    %c0_i32_0 = arith.constant 0 : i32
    %c0_i32_1 = arith.constant 0 : i32
    return %arg0, %c0_i32, %c0_i32_0 : i32, i32, i32
  }
  func.func @transform_1(%arg0: i32) -> (i32, i32, i32) {
    %c0_i32 = arith.constant 0 : i32
    %c0_i32_0 = arith.constant 0 : i32
    %c0_i32_1 = arith.constant 0 : i32
    return %arg0, %c0_i32, %c0_i32_0 : i32, i32, i32
  }
  func.func @transform_2(%arg0: i32) -> (i32, i32) {
    %c0_i32 = arith.constant 0 : i32
    %c0_i32_0 = arith.constant 0 : i32
    %c0_i32_1 = arith.constant 0 : i32
    return %c0_i32, %c0_i32_0 : i32, i32
  }
  func.func @transform_3(%arg0: i32) -> (i32, i32) {
    %c0_i32 = arith.constant 0 : i32
    %c0_i32_0 = arith.constant 0 : i32
    %c0_i32_1 = arith.constant 0 : i32
    return %c0_i32, %c0_i32_0 : i32, i32
  }
  func.func @transform_4(%arg0: i32) -> (i32, i32) {
    %c0_i32 = arith.constant 0 : i32
    %c0_i32_0 = arith.constant 0 : i32
    %c0_i32_1 = arith.constant 0 : i32
    return %c0_i32, %c0_i32_0 : i32, i32
  }
  func.func @transform_5(%arg0: i32) -> (i32, i32) {
    %c0_i32 = arith.constant 0 : i32
    %c0_i32_0 = arith.constant 0 : i32
    %c0_i32_1 = arith.constant 0 : i32
    return %c0_i32, %c0_i32_0 : i32, i32
  }
  func.func @transform_6(%arg0: i32) -> (i32, i32) {
    %c0_i32 = arith.constant 0 : i32
    %c0_i32_0 = arith.constant 0 : i32
    %c0_i32_1 = arith.constant 0 : i32
    return %c0_i32, %c0_i32_0 : i32, i32
  }
  func.func @transform_7(%arg0: i32) -> (i32, i32) {
    %c0_i32 = arith.constant 0 : i32
    %c0_i32_0 = arith.constant 0 : i32
    %c0_i32_1 = arith.constant 0 : i32
    return %c0_i32, %c0_i32_0 : i32, i32
  }
  func.func @transform_8(%arg0: i32) -> (i32, i32) {
    %c0_i32 = arith.constant 0 : i32
    %c0_i32_0 = arith.constant 0 : i32
    %c0_i32_1 = arith.constant 0 : i32
    return %c0_i32, %c0_i32_0 : i32, i32
  }
  func.func @transform_9(%arg0: i32) -> (i32, i32) {
    %c0_i32 = arith.constant 0 : i32
    %c0_i32_0 = arith.constant 0 : i32
    %c0_i32_1 = arith.constant 0 : i32
    return %c0_i32, %c0_i32_0 : i32, i32
  }
  func.func @transform_10(%arg0: i32) -> (i32, i32, i32) {
    %c0_i32 = arith.constant 0 : i32
    %c0_i32_0 = arith.constant 0 : i32
    %c0_i32_1 = arith.constant 0 : i32
    return %arg0, %c0_i32, %c0_i32_0 : i32, i32, i32
  }
  func.func @transform_11(%arg0: i32) -> (i32, i32, i32) {
    %c0_i32 = arith.constant 0 : i32
    %c0_i32_0 = arith.constant 0 : i32
    %c0_i32_1 = arith.constant 0 : i32
    return %arg0, %c0_i32, %c0_i32_0 : i32, i32, i32
  }
}

</mosaic_0001>

<llo_original>
// kernel: tpu_custom_call.1
$region0: #{tpu_custom_call.1}
  #allocation0 [shape = 'u32[]', space=smem, size = 0x4, offset = 0x4, fixed_abs, tag = 'smem constant byte address 0x4 - core index']
  #allocation1 [shape = 'u32[144,128]{1,0:T(1,128)}', space=vmem, size = 0x12000, scoped, tag = 'internal scratch']
  %s0 = inlined_call_operand.hbm [shape: f32[2,8,32], index: 0, kind: input, shape index: {}]
  %s1 = inlined_call_operand.hbm [shape: f32[2,8,32], index: 1, kind: input, shape index: {}]
  %s2 = inlined_call_operand.hbm [shape: bf16[32,32], index: 2, kind: input, shape index: {}]
  %s3 = inlined_call_operand.vmem [shape: f32[1,32], index: 3, kind: input, shape index: {}]
  %s4 = inlined_call_operand.hbm [shape: bf16[32,64], index: 4, kind: input, shape index: {}]
  %s5 = inlined_call_operand.vmem [shape: f32[1,64], index: 5, kind: input, shape index: {}]
  %s6 = inlined_call_operand.hbm [shape: bf16[32,32], index: 6, kind: input, shape index: {}]
  %s7 = inlined_call_operand.hbm [shape: f32[1,32], index: 7, kind: input, shape index: {}]
  %s8 = inlined_call_operand.hbm [shape: f32[1,32], index: 8, kind: input, shape index: {}]
  %s9 = inlined_call_operand.hbm [shape: f32[1,32], index: 9, kind: input, shape index: {}]
  %s10 = inlined_call_operand.vmem [shape: f32[2,8,8], index: 10, kind: input, shape index: {}]
  %s11 = inlined_call_operand.hbm [shape: f32[2,8,32], index: 11, kind: output, shape index: {}]
  %s12 = sld [smem:[#allocation0]]
  $region109: #{tpu_custom_call.1} parent=0
    _
  %s14 = ssub.s32 1, %s12
  %s15 = scalar_select 0, %s14, %s12
  $region1: #{tpu_custom_call.1} parent=0
    #allocation2 [shape = 'u8[8192]{0}', space=vmem, size = 0x2000, scoped, tag = 'input window, operand 0']
    #allocation3 [shape = 's32[2]{0}', space=sflag, size = 0x8, scoped, tag = 'scoped memory for tpu_custom_call.1']
    #allocation4 [shape = 's32[2]{0}', space=sflag, size = 0x8, scoped, tag = 'scoped memory for tpu_custom_call.1']
    #allocation5 [shape = 'u8[8192]{0}', space=vmem, size = 0x2000, scoped, tag = 'input window, operand 1']
    #allocation6 [shape = 's32[2]{0}', space=sflag, size = 0x8, scoped, tag = 'scoped memory for tpu_custom_call.1']
    #allocation7 [shape = 'u8[8192]{0}', space=vmem, size = 0x2000, scoped, tag = 'input window, operand 2, single buffered']
    #allocation8 [shape = 'u8[8192]{0}', space=vmem, size = 0x2000, scoped, tag = 'input window, operand 4, single buffered']
    #allocation9 [shape = 's32[1]{0}', space=sflag, size = 0x4, scoped, tag = 'scoped memory for tpu_custom_call.1']
    #allocation10 [shape = 'u8[8192]{0}', space=vmem, size = 0x2000, scoped, tag = 'input window, operand 6, single buffered']
    #allocation11 [shape = 'u8[512]{0}', space=vmem, size = 0x400, scoped, tag = 'input window, operand 7, single buffered']
    #allocation12 [shape = 's32[1]{0}', space=sflag, size = 0x4, scoped, tag = 'scoped memory for tpu_custom_call.1']
    #allocation13 [shape = 'u8[512]{0}', space=vmem, size = 0x400, scoped, tag = 'input window, operand 8, single buffered']
    #allocation14 [shape = 'u8[512]{0}', space=vmem, size = 0x400, scoped, tag = 'input window, operand 9, single buffered']
    #allocation15 [shape = 's32[1]{0}', space=sflag, size = 0x4, scoped, tag = 'scoped memory for tpu_custom_call.1']
    #allocation16 [shape = 'u8[8192]{0}', space=vmem, size = 0x2000, scoped, tag = 'output window, operand 0']
    %16 = vsyncpa [#allocation3], 0
    %s17 = scalar_lea.sflag [#allocation3], 1
    %18 = vsyncpa %s17, 0
    %19 = vsyncpa [#allocation6], 0
    %s20 = scalar_lea.sflag [#allocation6], 1
    %21 = vsyncpa %s20, 0
    %22 = vsyncpa [#allocation9], 0
    %23 = vsyncpa [#allocation12], 0
    %24 = vsyncpa [#allocation15], 0
    %25 = vsyncpa [#allocation4], 0
    %s26 = scalar_lea.sflag [#allocation4], 1
    %27 = vsyncpa %s26, 0
    loop: start=0, step=1, limit=4
    $region2: #{tpu_custom_call.1} parent=1 // loop_pre_header
      _
    $region3: #{tpu_custom_call.1} parent=1 // loop_header
      %s29 = sphi 0, %s33
      %p30 = scmp.ge.s32.totalorder %s29, 4
      %s39 = sphi 0, %s41
      %s42 = sphi 0, %s39
      %s43 = sphi 0, %s42
      %s59 = sphi 0, %s43
      %s65 = sphi 0, %s67
      %s68 = sphi 0, %s65
      %s69 = sphi 0, %s68
      %s85 = sphi 0, %s69
      %s89 = sphi 0, %s89
      %s91 = sphi 0, %s89
      %s92 = sphi 0, %s91
      %s106 = sphi 0, %s92
      %s110 = sphi 0, %s110
      %s112 = sphi 0, %s110
      %s113 = sphi 0, %s112
      %s127 = sphi 0, %s113
      %s131 = sphi 0, %s131
      %s133 = sphi 0, %s131
      %s134 = sphi 0, %s133
      %s148 = sphi 0, %s134
      %s152 = sphi 0, %s152
      %s154 = sphi 0, %s152
      %s155 = sphi 0, %s154
      %s169 = sphi 0, %s155
      %s173 = sphi 0, %s173
      %s175 = sphi 0, %s173
      %s176 = sphi 0, %s175
      %s190 = sphi 0, %s176
      %s194 = sphi 0, %s194
      %s196 = sphi 0, %s194
      %s197 = sphi 0, %s196
      %s211 = sphi 0, %s197
      %s215 = sphi 0, %s215
      %s217 = sphi 0, %s215
      %s218 = sphi 0, %s217
      %s232 = sphi 0, %s218
      %s236 = sphi 0, %s236
      %s238 = sphi 0, %s236
      %s239 = sphi 0, %s238
      %s253 = sphi 0, %s239
      %s259 = sphi 0, %s261
      %s262 = sphi 0, %s259
      %s263 = sphi 0, %s262
      %s279 = sphi 0, %s263
      %s285 = sphi 0, %s287
      %s288 = sphi 0, %s285
      %s289 = sphi 0, %s288
      %s305 = sphi 0, %s289
    $region4: #{tpu_custom_call.1} parent=1 // loop_header_branch
      %32 = sbr.rel (%p30) target = $region8
    $region5: #{tpu_custom_call.1} parent=1 // loop_body
      %s34 = ssub.s32 %s29, 1
      %s35 = ssub.s32 %s29, 2
      %s36 = sadd.s32 %s29, 1
      %s37 = ssub.s32 %s29, %s36
      %p38 = scmp.eq.s32.totalorder %s37, 0
      %s40 = sadd.s32 %s39, 1
      %s41 = scalar_select %p38, %s39, %s40
      %p44 = pneg %p38
      %p45 = scmp.eq.s32.totalorder %s29, 1
      %p46 = por %p44, %p45
      %p47 = scmp.ne.s32.totalorder %s39, %s42
      %p48 = scmp.eq.s32.totalorder %s29, 0
      %p49 = por %p47, %p48
      %p50 = scmp.ne.s32.totalorder %s39, %s42
      %p51 = scmp.eq.s32.totalorder %s34, 1
      %p52 = por %p50, %p51
      %p53 = scmp.ne.s32.totalorder %s42, %s43
      %p54 = scmp.eq.s32.totalorder %s34, 0
      %p55 = por %p53, %p54
      %p56 = scmp.ne.s32.totalorder %s42, %s43
      %p57 = scmp.eq.s32.totalorder %s35, 1
      %p58 = por %p56, %p57
      %p60 = scmp.ne.s32.totalorder %s43, %s59
      %p61 = scmp.eq.s32.totalorder %s35, 0
      %p62 = por %p60, %p61
      %s63 = ssub.s32 %s29, %s36
      %p64 = scmp.eq.s32.totalorder %s63, 0
      %s66 = sadd.s32 %s65, 1
      %s67 = scalar_select %p64, %s65, %s66
      %p70 = pneg %p64
      %p71 = scmp.eq.s32.totalorder %s29, 1
      %p72 = por %p70, %p71
      %p73 = scmp.ne.s32.totalorder %s65, %s68
      %p74 = scmp.eq.s32.totalorder %s29, 0
      %p75 = por %p73, %p74
      %p76 = scmp.ne.s32.totalorder %s65, %s68
      %p77 = scmp.eq.s32.totalorder %s34, 1
      %p78 = por %p76, %p77
      %p79 = scmp.ne.s32.totalorder %s68, %s69
      %p80 = scmp.eq.s32.totalorder %s34, 0
      %p81 = por %p79, %p80
      %p82 = scmp.ne.s32.totalorder %s68, %s69
      %p83 = scmp.eq.s32.totalorder %s35, 1
      %p84 = por %p82, %p83
      %p86 = scmp.ne.s32.totalorder %s69, %s85
      %p87 = scmp.eq.s32.totalorder %s35, 0
      %p88 = por %p86, %p87
      %s90 = sadd.s32 %s89, 1
      %p93 = scmp.eq.s32.totalorder %s29, 1
      %p94 = scmp.ne.s32.totalorder %s89, %s91
      %p95 = scmp.eq.s32.totalorder %s29, 0
      %p96 = por %p94, %p95
      %p97 = scmp.ne.s32.totalorder %s89, %s91
      %p98 = scmp.eq.s32.totalorder %s34, 1
      %p99 = por %p97, %p98
      %p100 = scmp.ne.s32.totalorder %s91, %s92
      %p101 = scmp.eq.s32.totalorder %s34, 0
      %p102 = por %p100, %p101
      %p103 = scmp.ne.s32.totalorder %s91, %s92
      %p104 = scmp.eq.s32.totalorder %s35, 1
      %p105 = por %p103, %p104
      %p107 = scmp.ne.s32.totalorder %s92, %s106
      %p108 = scmp.eq.s32.totalorder %s35, 0
      %p109 = por %p107, %p108
      %s111 = sadd.s32 %s110, 1
      %p114 = scmp.eq.s32.totalorder %s29, 1
      %p115 = scmp.ne.s32.totalorder %s110, %s112
      %p116 = scmp.eq.s32.totalorder %s29, 0
      %p117 = por %p115, %p116
      %p118 = scmp.ne.s32.totalorder %s110, %s112
      %p119 = scmp.eq.s32.totalorder %s34, 1
      %p120 = por %p118, %p119
      %p121 = scmp.ne.s32.totalorder %s112, %s113
      %p122 = scmp.eq.s32.totalorder %s34, 0
      %p123 = por %p121, %p122
      %p124 = scmp.ne.s32.totalorder %s112, %s113
      %p125 = scmp.eq.s32.totalorder %s35, 1
      %p126 = por %p124, %p125
      %p128 = scmp.ne.s32.totalorder %s113, %s127
      %p129 = scmp.eq.s32.totalorder %s35, 0
      %p130 = por %p128, %p129
      %s132 = sadd.s32 %s131, 1
      %p135 = scmp.eq.s32.totalorder %s29, 1
      %p136 = scmp.ne.s32.totalorder %s131, %s133
      %p137 = scmp.eq.s32.totalorder %s29, 0
      %p138 = por %p136, %p137
      %p139 = scmp.ne.s32.totalorder %s131, %s133
      %p140 = scmp.eq.s32.totalorder %s34, 1
      %p141 = por %p139, %p140
      %p142 = scmp.ne.s32.totalorder %s133, %s134
      %p143 = scmp.eq.s32.totalorder %s34, 0
      %p144 = por %p142, %p143
      %p145 = scmp.ne.s32.totalorder %s133, %s134
      %p146 = scmp.eq.s32.totalorder %s35, 1
      %p147 = por %p145, %p146
      %p149 = scmp.ne.s32.totalorder %s134, %s148
      %p150 = scmp.eq.s32.totalorder %s35, 0
      %p151 = por %p149, %p150
      %s153 = sadd.s32 %s152, 1
      %p156 = scmp.eq.s32.totalorder %s29, 1
      %p157 = scmp.ne.s32.totalorder %s152, %s154
      %p158 = scmp.eq.s32.totalorder %s29, 0
      %p159 = por %p157, %p158
      %p160 = scmp.ne.s32.totalorder %s152, %s154
      %p161 = scmp.eq.s32.totalorder %s34, 1
      %p162 = por %p160, %p161
      %p163 = scmp.ne.s32.totalorder %s154, %s155
      %p164 = scmp.eq.s32.totalorder %s34, 0
      %p165 = por %p163, %p164
      %p166 = scmp.ne.s32.totalorder %s154, %s155
      %p167 = scmp.eq.s32.totalorder %s35, 1
      %p168 = por %p166, %p167
      %p170 = scmp.ne.s32.totalorder %s155, %s169
      %p171 = scmp.eq.s32.totalorder %s35, 0
      %p172 = por %p170, %p171
      %s174 = sadd.s32 %s173, 1
      %p177 = scmp.eq.s32.totalorder %s29, 1
      %p178 = scmp.ne.s32.totalorder %s173, %s175
      %p179 = scmp.eq.s32.totalorder %s29, 0
      %p180 = por %p178, %p179
      %p181 = scmp.ne.s32.totalorder %s173, %s175
      %p182 = scmp.eq.s32.totalorder %s34, 1
      %p183 = por %p181, %p182
      %p184 = scmp.ne.s32.totalorder %s175, %s176
      %p185 = scmp.eq.s32.totalorder %s34, 0
      %p186 = por %p184, %p185
      %p187 = scmp.ne.s32.totalorder %s175, %s176
      %p188 = scmp.eq.s32.totalorder %s35, 1
      %p189 = por %p187, %p188
      %p191 = scmp.ne.s32.totalorder %s176, %s190
      %p192 = scmp.eq.s32.totalorder %s35, 0
      %p193 = por %p191, %p192
      %s195 = sadd.s32 %s194, 1
      %p198 = scmp.eq.s32.totalorder %s29, 1
      %p199 = scmp.ne.s32.totalorder %s194, %s196
      %p200 = scmp.eq.s32.totalorder %s29, 0
      %p201 = por %p199, %p200
      %p202 = scmp.ne.s32.totalorder %s194, %s196
      %p203 = scmp.eq.s32.totalorder %s34, 1
      %p204 = por %p202, %p203
      %p205 = scmp.ne.s32.totalorder %s196, %s197
      %p206 = scmp.eq.s32.totalorder %s34, 0
      %p207 = por %p205, %p206
      %p208 = scmp.ne.s32.totalorder %s196, %s197
      %p209 = scmp.eq.s32.totalorder %s35, 1
      %p210 = por %p208, %p209
      %p212 = scmp.ne.s32.totalorder %s197, %s211
      %p213 = scmp.eq.s32.totalorder %s35, 0
      %p214 = por %p212, %p213
      %s216 = sadd.s32 %s215, 1
      %p219 = scmp.eq.s32.totalorder %s29, 1
      %p220 = scmp.ne.s32.totalorder %s215, %s217
      %p221 = scmp.eq.s32.totalorder %s29, 0
      %p222 = por %p220, %p221
      %p223 = scmp.ne.s32.totalorder %s215, %s217
      %p224 = scmp.eq.s32.totalorder %s34, 1
      %p225 = por %p223, %p224
      %p226 = scmp.ne.s32.totalorder %s217, %s218
      %p227 = scmp.eq.s32.totalorder %s34, 0
      %p228 = por %p226, %p227
      %p229 = scmp.ne.s32.totalorder %s217, %s218
      %p230 = scmp.eq.s32.totalorder %s35, 1
      %p231 = por %p229, %p230
      %p233 = scmp.ne.s32.totalorder %s218, %s232
      %p234 = scmp.eq.s32.totalorder %s35, 0
      %p235 = por %p233, %p234
      %s237 = sadd.s32 %s236, 1
      %p240 = scmp.eq.s32.totalorder %s29, 1
      %p241 = scmp.ne.s32.totalorder %s236, %s238
      %p242 = scmp.eq.s32.totalorder %s29, 0
      %p243 = por %p241, %p242
      %p244 = scmp.ne.s32.totalorder %s236, %s238
      %p245 = scmp.eq.s32.totalorder %s34, 1
      %p246 = por %p244, %p245
      %p247 = scmp.ne.s32.totalorder %s238, %s239
      %p248 = scmp.eq.s32.totalorder %s34, 0
      %p249 = por %p247, %p248
      %p250 = scmp.ne.s32.totalorder %s238, %s239
      %p251 = scmp.eq.s32.totalorder %s35, 1
      %p252 = por %p250, %p251
      %p254 = scmp.ne.s32.totalorder %s239, %s253
      %p255 = scmp.eq.s32.totalorder %s35, 0
      %p256 = por %p254, %p255
      %s257 = ssub.s32 %s29, %s36
      %p258 = scmp.eq.s32.totalorder %s257, 0
      %s260 = sadd.s32 %s259, 1
      %s261 = scalar_select %p258, %s259, %s260
      %p264 = pneg %p258
      %p265 = scmp.eq.s32.totalorder %s29, 1
      %p266 = por %p264, %p265
      %p267 = scmp.ne.s32.totalorder %s259, %s262
      %p268 = scmp.eq.s32.totalorder %s29, 0
      %p269 = por %p267, %p268
      %p270 = scmp.ne.s32.totalorder %s259, %s262
      %p271 = scmp.eq.s32.totalorder %s34, 1
      %p272 = por %p270, %p271
      %p273 = scmp.ne.s32.totalorder %s262, %s263
      %p274 = scmp.eq.s32.totalorder %s34, 0
      %p275 = por %p273, %p274
      %p276 = scmp.ne.s32.totalorder %s262, %s263
      %p277 = scmp.eq.s32.totalorder %s35, 1
      %p278 = por %p276, %p277
      %p280 = scmp.ne.s32.totalorder %s263, %s279
      %p281 = scmp.eq.s32.totalorder %s35, 0
      %p282 = por %p280, %p281
      %s283 = ssub.s32 %s29, %s36
      %p284 = scmp.eq.s32.totalorder %s283, 0
      %s286 = sadd.s32 %s285, 1
      %s287 = scalar_select %p284, %s285, %s286
      %p290 = pneg %p284
      %p291 = scmp.eq.s32.totalorder %s29, 1
      %p292 = por %p290, %p291
      %p293 = scmp.ne.s32.totalorder %s285, %s288
      %p294 = scmp.eq.s32.totalorder %s29, 0
      %p295 = por %p293, %p294
      %p296 = scmp.ne.s32.totalorder %s285, %s288
      %p297 = scmp.eq.s32.totalorder %s34, 1
      %p298 = por %p296, %p297
      %p299 = scmp.ne.s32.totalorder %s288, %s289
      %p300 = scmp.eq.s32.totalorder %s34, 0
      %p301 = por %p299, %p300
      %p302 = scmp.ne.s32.totalorder %s288, %s289
      %p303 = scmp.eq.s32.totalorder %s35, 1
      %p304 = por %p302, %p303
      %p306 = scmp.ne.s32.totalorder %s289, %s305
      %p307 = scmp.eq.s32.totalorder %s35, 0
      %p308 = por %p306, %p307
      %p309 = scmp.le.s32.totalorder 1, %s29
      %p310 = scmp.lt.s32.totalorder %s29, 3
      %p311 = pnand %p309, %p310
      %p312 = pneg %p311
      // Predicated region
      $region9: #{tpu_custom_call.1} parent=5 // pred_check
        _
      $region10: #{tpu_custom_call.1} parent=5 // pred_check_branch
        %314 = sbr.rel (%p311) target = $region12
      $region11: #{tpu_custom_call.1} parent=5 // pred_region
        %s315 = ssub.s32 %s29, 1
        // Predicated region
        $region13: #{tpu_custom_call.1} parent=11 // pred_check
          %p316 = pneg %p102
        $region14: #{tpu_custom_call.1} parent=11 // pred_check_branch
          %318 = sbr.rel (%p316) target = $region16
        $region15: #{tpu_custom_call.1} parent=11 // pred_region
          %s320 = ssub.s32 256, 256
          %321 = vsyncadd [#allocation6], %s320
          %s322 = sshll.u32 [#allocation7], 4
          %s323 = int_to_ptr.vmem [resolvable:$true] %s322
          %328 = dma.hbm_to_vmem [thread:$0]  %s2, 256, %s323, [#allocation6], 64, 64, 4
        $region16: #{tpu_custom_call.1} parent=11 // pred_fallthru
          _
        // Predicated region
        $region17: #{tpu_custom_call.1} parent=11 // pred_check
          %p329 = pneg %p123
        $region18: #{tpu_custom_call.1} parent=11 // pred_check_branch
          %331 = sbr.rel (%p329) target = $region20
        $region19: #{tpu_custom_call.1} parent=11 // pred_region
          _
        $region20: #{tpu_custom_call.1} parent=11 // pred_fallthru
          _
        // Predicated region
        $region21: #{tpu_custom_call.1} parent=11 // pred_check
          %p332 = pneg %p144
        $region22: #{tpu_custom_call.1} parent=11 // pred_check_branch
          %334 = sbr.rel (%p332) target = $region24
        $region23: #{tpu_custom_call.1} parent=11 // pred_region
          %s336 = ssub.s32 256, 256
          %337 = vsyncadd [#allocation9], %s336
          %s338 = sshll.u32 [#allocation8], 4
          %s339 = int_to_ptr.vmem [resolvable:$true] %s338
          %344 = dma.hbm_to_vmem [thread:$0]  %s4, 256, %s339, [#allocation9], 64, 64, 4
        $region24: #{tpu_custom_call.1} parent=11 // pred_fallthru
          _
        // Predicated region
        $region25: #{tpu_custom_call.1} parent=11 // pred_check
          %p345 = pneg %p165
        $region26: #{tpu_custom_call.1} parent=11 // pred_check_branch
          %347 = sbr.rel (%p345) target = $region28
        $region27: #{tpu_custom_call.1} parent=11 // pred_region
          _
        $region28: #{tpu_custom_call.1} parent=11 // pred_fallthru
          _
        // Predicated region
        $region29: #{tpu_custom_call.1} parent=11 // pred_check
          %p348 = pneg %p186
        $region30: #{tpu_custom_call.1} parent=11 // pred_check_branch
          %350 = sbr.rel (%p348) target = $region32
        $region31: #{tpu_custom_call.1} parent=11 // pred_region
          %s352 = ssub.s32 256, 256
          %353 = vsyncadd [#allocation9], %s352
          %s354 = sshll.u32 [#allocation10], 4
          %s355 = int_to_ptr.vmem [resolvable:$true] %s354
          %360 = dma.hbm_to_vmem [thread:$0]  %s6, 256, %s355, [#allocation9], 64, 64, 4
        $region32: #{tpu_custom_call.1} parent=11 // pred_fallthru
          _
        // Predicated region
        $region33: #{tpu_custom_call.1} parent=11 // pred_check
          %p361 = pneg %p207
        $region34: #{tpu_custom_call.1} parent=11 // pred_check_branch
          %363 = sbr.rel (%p361) target = $region36
        $region35: #{tpu_custom_call.1} parent=11 // pred_region
          %s365 = ssub.s32 16, 16
          %366 = vsyncadd [#allocation12], %s365
          %s368 = sshll.u32 [#allocation11], 4
          %s369 = int_to_ptr.vmem [resolvable:$true] %s368
          %371 = dma.hbm_to_vmem [thread:$0]  %s7, 16, %s369, [#allocation12]
        $region36: #{tpu_custom_call.1} parent=11 // pred_fallthru
          _
        // Predicated region
        $region37: #{tpu_custom_call.1} parent=11 // pred_check
          %p372 = pneg %p228
        $region38: #{tpu_custom_call.1} parent=11 // pred_check_branch
          %374 = sbr.rel (%p372) target = $region40
        $region39: #{tpu_custom_call.1} parent=11 // pred_region
          %s376 = ssub.s32 16, 16
          %377 = vsyncadd [#allocation12], %s376
          %s379 = sshll.u32 [#allocation13], 4
          %s380 = int_to_ptr.vmem [resolvable:$true] %s379
          %382 = dma.hbm_to_vmem [thread:$0]  %s8, 16, %s380, [#allocation12]
        $region40: #{tpu_custom_call.1} parent=11 // pred_fallthru
          _
        // Predicated region
        $region41: #{tpu_custom_call.1} parent=11 // pred_check
          %p383 = pneg %p249
        $region42: #{tpu_custom_call.1} parent=11 // pred_check_branch
          %385 = sbr.rel (%p383) target = $region44
        $region43: #{tpu_custom_call.1} parent=11 // pred_region
          %s387 = ssub.s32 16, 16
          %388 = vsyncadd [#allocation15], %s387
          %s390 = sshll.u32 [#allocation14], 4
          %s391 = int_to_ptr.vmem [resolvable:$true] %s390
          %393 = dma.hbm_to_vmem [thread:$0]  %s9, 16, %s391, [#allocation15]
        $region44: #{tpu_custom_call.1} parent=11 // pred_fallthru
          _
      $region12: #{tpu_custom_call.1} parent=5 // pred_fallthru
        _
      %p394 = scmp.lt.s32.totalorder %s29, 2
      // Predicated region
      $region45: #{tpu_custom_call.1} parent=5 // pred_check
        %p395 = pneg %p394
      $region46: #{tpu_custom_call.1} parent=5 // pred_check_branch
        %397 = sbr.rel (%p395) target = $region48
      $region47: #{tpu_custom_call.1} parent=5 // pred_region
        // Predicated region
        $region49: #{tpu_custom_call.1} parent=47 // pred_check
          %p398 = pneg %p49
        $region50: #{tpu_custom_call.1} parent=47 // pred_check_branch
          %400 = sbr.rel (%p398) target = $region52
        $region51: #{tpu_custom_call.1} parent=47 // pred_region
          %s401 = sand.u32 %s39, 1
          %s402 = scalar_lea.sflag [#allocation3], %s401
          %s403 = sand.u32 %s39, 1
          %s404 = smul.addr %s403, 8
          %s405 = scalar_lea.vmem [#allocation2], %s404
          %s407 = ssub.s32 128, 128
          %408 = vsyncadd %s402, %s407
          %s409 = smul.addr %s29, 128
          %s410 = scalar_lea.hbm %s0, %s409
          %s412 = sshll.u32 %s405, 4
          %s413 = int_to_ptr.vmem [resolvable:$true] %s412
          %415 = dma.hbm_to_vmem [thread:$0]  %s410, 128, %s413, %s402
        $region52: #{tpu_custom_call.1} parent=47 // pred_fallthru
          _
        // Predicated region
        $region53: #{tpu_custom_call.1} parent=47 // pred_check
          %p416 = pneg %p75
        $region54: #{tpu_custom_call.1} parent=47 // pred_check_branch
          %418 = sbr.rel (%p416) target = $region56
        $region55: #{tpu_custom_call.1} parent=47 // pred_region
          %s419 = sand.u32 %s29, 1
          %s420 = scalar_lea.sflag [#allocation6], %s419
          %s421 = sand.u32 %s65, 1
          %s422 = smul.addr %s421, 8
          %s423 = scalar_lea.vmem [#allocation5], %s422
          %s425 = ssub.s32 128, 128
          %426 = vsyncadd %s420, %s425
          %s427 = smul.addr %s29, 128
          %s428 = scalar_lea.hbm %s1, %s427
          %s430 = sshll.u32 %s423, 4
          %s431 = int_to_ptr.vmem [resolvable:$true] %s430
          %433 = dma.hbm_to_vmem [thread:$0]  %s428, 128, %s431, %s420
        $region56: #{tpu_custom_call.1} parent=47 // pred_fallthru
          _
        // Predicated region
        $region57: #{tpu_custom_call.1} parent=47 // pred_check
          %p434 = pneg %p269
        $region58: #{tpu_custom_call.1} parent=47 // pred_check_branch
          %436 = sbr.rel (%p434) target = $region60
        $region59: #{tpu_custom_call.1} parent=47 // pred_region
          %p437 = scmp.lt.s32.totalorder %s29, 1
          %s438 = scalar_select %p437, %s29, 1
          %s439 = smul.addr %s438, 8
          %s440 = scalar_lea.vmem %s10, %s439
        $region60: #{tpu_custom_call.1} parent=47 // pred_fallthru
          _
      $region48: #{tpu_custom_call.1} parent=5 // pred_fallthru
        _
      %p441 = scmp.le.s32.totalorder 1, %s29
      %p442 = scmp.lt.s32.totalorder %s29, 3
      %p443 = pnand %p441, %p442
      %p444 = pneg %p443
      // Predicated region
      $region61: #{tpu_custom_call.1} parent=5 // pred_check
        _
      $region62: #{tpu_custom_call.1} parent=5 // pred_check_branch
        %446 = sbr.rel (%p443) target = $region64
      $region63: #{tpu_custom_call.1} parent=5 // pred_region
        %s447 = ssub.s32 %s29, 1
        %s448 = sand.u32 %s42, 1
        %s449 = scalar_lea.sflag [#allocation3], %s448
        %s450 = sand.u32 %s42, 1
        %s451 = smul.addr %s450, 8
        %s452 = scalar_lea.vmem [#allocation2], %s451
        // Predicated region
        $region65: #{tpu_custom_call.1} parent=63 // pred_check
          %p453 = pneg %p55
        $region66: #{tpu_custom_call.1} parent=63 // pred_check_branch
          %455 = sbr.rel (%p453) target = $region68
        $region67: #{tpu_custom_call.1} parent=63 // pred_region
          %456 = dma.done %s449, 128
        $region68: #{tpu_custom_call.1} parent=63 // pred_fallthru
          _
        %s457 = sand.u32 %s34, 1
        %s458 = scalar_lea.sflag [#allocation6], %s457
        %s459 = sand.u32 %s68, 1
        %s460 = smul.addr %s459, 8
        %s461 = scalar_lea.vmem [#allocation5], %s460
        // Predicated region
        $region69: #{tpu_custom_call.1} parent=63 // pred_check
          %p462 = pneg %p81
        $region70: #{tpu_custom_call.1} parent=63 // pred_check_branch
          %464 = sbr.rel (%p462) target = $region72
        $region71: #{tpu_custom_call.1} parent=63 // pred_region
          %465 = dma.done %s458, 128
        $region72: #{tpu_custom_call.1} parent=63 // pred_fallthru
          _
        // Predicated region
        $region73: #{tpu_custom_call.1} parent=63 // pred_check
          %p466 = pneg %p102
        $region74: #{tpu_custom_call.1} parent=63 // pred_check_branch
          %468 = sbr.rel (%p466) target = $region76
        $region75: #{tpu_custom_call.1} parent=63 // pred_region
          %469 = dma.done [#allocation6], 256
        $region76: #{tpu_custom_call.1} parent=63 // pred_fallthru
          _
        // Predicated region
        $region77: #{tpu_custom_call.1} parent=63 // pred_check
          %p470 = pneg %p144
        $region78: #{tpu_custom_call.1} parent=63 // pred_check_branch
          %472 = sbr.rel (%p470) target = $region80
        $region79: #{tpu_custom_call.1} parent=63 // pred_region
          %473 = dma.done [#allocation9], 256
        $region80: #{tpu_custom_call.1} parent=63 // pred_fallthru
          _
        // Predicated region
        $region81: #{tpu_custom_call.1} parent=63 // pred_check
          %p474 = pneg %p186
        $region82: #{tpu_custom_call.1} parent=63 // pred_check_branch
          %476 = sbr.rel (%p474) target = $region84
        $region83: #{tpu_custom_call.1} parent=63 // pred_region
          %477 = dma.done [#allocation9], 256
        $region84: #{tpu_custom_call.1} parent=63 // pred_fallthru
          _
        // Predicated region
        $region85: #{tpu_custom_call.1} parent=63 // pred_check
          %p478 = pneg %p207
        $region86: #{tpu_custom_call.1} parent=63 // pred_check_branch
          %480 = sbr.rel (%p478) target = $region88
        $region87: #{tpu_custom_call.1} parent=63 // pred_region
          %481 = dma.done [#allocation12], 16
        $region88: #{tpu_custom_call.1} parent=63 // pred_fallthru
          _
        // Predicated region
        $region89: #{tpu_custom_call.1} parent=63 // pred_check
          %p482 = pneg %p228
        $region90: #{tpu_custom_call.1} parent=63 // pred_check_branch
          %484 = sbr.rel (%p482) target = $region92
        $region91: #{tpu_custom_call.1} parent=63 // pred_region
          %485 = dma.done [#allocation12], 16
        $region92: #{tpu_custom_call.1} parent=63 // pred_fallthru
          _
        // Predicated region
        $region93: #{tpu_custom_call.1} parent=63 // pred_check
          %p486 = pneg %p249
        $region94: #{tpu_custom_call.1} parent=63 // pred_check_branch
          %488 = sbr.rel (%p486) target = $region96
        $region95: #{tpu_custom_call.1} parent=63 // pred_region
          %489 = dma.done [#allocation15], 16
        $region96: #{tpu_custom_call.1} parent=63 // pred_fallthru
          _
        %s490 = sand.u32 %s42, 1
        %s491 = scalar_lea.sflag [#allocation3], %s490
        %s492 = sand.u32 %s42, 1
        %s493 = smul.addr %s492, 8
        %s494 = scalar_lea.vmem [#allocation2], %s493
        %p495 = pneg %p55
        %p496 = pneg %p52
        %s497 = sand.u32 %s34, 1
        %s498 = scalar_lea.sflag [#allocation6], %s497
        %s499 = sand.u32 %s68, 1
        %s500 = smul.addr %s499, 8
        %s501 = scalar_lea.vmem [#allocation5], %s500
        %p502 = pneg %p81
        %p503 = pneg %p78
        %p504 = pneg %p102
        %p505 = pneg %p99
        %p506 = pneg %p123
        %p507 = pneg %p120
        %p508 = pneg %p144
        %p509 = pneg %p141
        %p510 = pneg %p165
        %p511 = pneg %p162
        %p512 = pneg %p186
        %p513 = pneg %p183
        %p514 = pneg %p207
        %p515 = pneg %p204
        %p516 = pneg %p228
        %p517 = pneg %p225
        %p518 = pneg %p249
        %p519 = pneg %p246
        %p520 = scmp.lt.s32.totalorder %s34, 1
        %s521 = scalar_select %p520, %s34, 1
        %s522 = smul.addr %s521, 8
        %s523 = scalar_lea.vmem %s10, %s522
        %p524 = pneg %p275
        %p525 = pneg %p272
        %p526 = pneg %p301
        %p527 = pneg %p298
        %s528 = sand.u32 %s288, 1
        %s529 = scalar_lea.sflag [#allocation4], %s528
        %s530 = sand.u32 %s288, 1
        %s531 = smul.addr %s530, 8
        %s532 = scalar_lea.vmem [#allocation16], %s531
        %p533 = scmp.lt.s32.totalorder %s34, 1
        %s534 = scalar_select %p533, %s34, 1
        %s535 = smul.addr %s534, 8
        %s536 = scalar_lea.vmem %s10, %s535
        %v538 = vld [vmem:[%s452] sm:$0xff]
        %v539 = vld [vmem:[%s461] sm:$0xff]
        %v540 = vld [vmem:[%s536] sm:$0xff]
        %v541 = vpack.c.bf16 %v538, %v538
        %v542 = vpack.c.bf16 %v539, %v539
        %v543 = vld [vmem:[#allocation7] sm:$0xf]
        %v544 = vld [vmem:[#allocation7 + $0x4] sm:$0xf]
        %v545 = vld [vmem:[#allocation7 + $0x8] sm:$0xf]
        %v546 = vld [vmem:[#allocation7 + $0xc] sm:$0xf]
        %v547 = vld [vmem:[%s3] sm:$0x1]
        %v549 = vlaneseq
        %v550 = vshrl.u32 %v549, 7
        %v551 = vsub.s32 0, %v550
        %v552 = vrot.slane %v547, %v551
        %v558 = vunpack.c.l.b16 %v543
        %v559 = vunpack.c.l.b16 %v544
        %v560 = vunpack.c.l.b16 %v545
        %v561 = vunpack.c.l.b16 %v546
        %v562 = vpack.c.b16 %v559, %v558
        %v563 = vpack.c.b16 %v561, %v560
        %vm566 = vcmask 261120
        %v568 = vsel %vm566, %v541, 0
        %570 = vmatprep.subr.bf16.mxu0 0
        %571 = vmatpush1.bf16.msra.mxu0 0
        %572 = vmatprep.subr.bf16.mxu0 0
        %573 = vmatpush1.bf16.msra.mxu0 0
        %574 = vmatprep.subr.bf16.mxu0 0
        %575 = vmatpush1.bf16.msra.mxu0 0
        %576 = vmatprep.subr.bf16.mxu0 0
        %577 = vmatpush1.bf16.msra.mxu0 0
        %578 = vmatprep.subr.bf16.mxu0 0
        %579 = vmatpush1.bf16.msra.mxu0 0
        %580 = vmatprep.subr.bf16.mxu0 0
        %581 = vmatpush1.bf16.msra.mxu0 0
        %582 = vmatprep.subr.bf16.mxu0 0
        %583 = vmatpush1.bf16.msra.mxu0 %v563
        %584 = vmatprep.subr.bf16.mxu0 0
        %585 = vmatpush1.bf16.msra.mxu0 %v562
        %586 = vmatprep.subr.bf16.mxu0 0
        %587 = vmatpush2.bf16.msra.mxu0 0
        %588 = vmatprep.subr.bf16.mxu0 0
        %589 = vmatpush2.bf16.msra.mxu0 0
        %590 = vmatprep.subr.bf16.mxu0 0
        %591 = vmatpush2.bf16.msra.mxu0 0
        %592 = vmatprep.subr.bf16.mxu0 0
        %593 = vmatpush2.bf16.msra.mxu0 0
        %594 = vmatprep.subr.bf16.mxu0 0
        %595 = vmatpush2.bf16.msra.mxu0 0
        %596 = vmatprep.subr.bf16.mxu0 0
        %597 = vmatpush2.bf16.msra.mxu0 0
        %598 = vmatprep.subr.bf16.mxu0 0
        %599 = vmatpush2.bf16.msra.mxu0 0
        %600 = vmatprep.subr.bf16.mxu0 0
        %601 = vmatpush2.bf16.msra.mxu0 0
        %602 = vmatprep.mubr.bf16.mxu0 0
        %603 = vmatmul.mubr.bf16.gmra.mxu0 %v568
        %v604 = vpop.f32.mrf.mxu0
        %v605 = vadd.f32 %v552, %v604
        %v606 = vpop.f32.mrf.mxu0
        %v607 = vpop.f32.mrf.mxu0
        %v608 = vpop.f32.mrf.mxu0
        %609 = vdwg.mxu0
        %v610 = vld [vmem:[#allocation8] sm:$0xf]
        %v611 = vld [vmem:[#allocation8 + $0x4] sm:$0xf]
        %v612 = vld [vmem:[#allocation8 + $0x8] sm:$0xf]
        %v613 = vld [vmem:[#allocation8 + $0xc] sm:$0xf]
        %v614 = vld [vmem:[%s5] sm:$0x1]
        %v616 = vlaneseq
        %v617 = vshrl.u32 %v616, 7
        %v618 = vsub.s32 0, %v617
        %v619 = vrot.slane %v614, %v618
        %v625 = vunpack.c.l.b16 %v610
        %v626 = vunpack.c.l.b16 %v611
        %v627 = vunpack.c.l.b16 %v612
        %v628 = vunpack.c.l.b16 %v613
        %v629 = vpack.c.b16 %v626, %v625
        %v630 = vpack.c.b16 %v628, %v627
        %v634 = vsel %vm566, %v542, 0
        %636 = vmatprep.subr.bf16.mxu0 0
        %637 = vmatpush1.bf16.msra.mxu0 0
        %638 = vmatprep.subr.bf16.mxu0 0
        %639 = vmatpush1.bf16.msra.mxu0 0
        %640 = vmatprep.subr.bf16.mxu0 0
        %641 = vmatpush1.bf16.msra.mxu0 0
        %642 = vmatprep.subr.bf16.mxu0 0
        %643 = vmatpush1.bf16.msra.mxu0 0
        %644 = vmatprep.subr.bf16.mxu0 0
        %645 = vmatpush1.bf16.msra.mxu0 0
        %646 = vmatprep.subr.bf16.mxu0 0
        %647 = vmatpush1.bf16.msra.mxu0 0
        %648 = vmatprep.subr.bf16.mxu0 0
        %649 = vmatpush1.bf16.msra.mxu0 %v630
        %650 = vmatprep.subr.bf16.mxu0 0
        %651 = vmatpush1.bf16.msra.mxu0 %v629
        %652 = vmatprep.subr.bf16.mxu0 0
        %653 = vmatpush2.bf16.msra.mxu0 0
        %654 = vmatprep.subr.bf16.mxu0 0
        %655 = vmatpush2.bf16.msra.mxu0 0
        %656 = vmatprep.subr.bf16.mxu0 0
        %657 = vmatpush2.bf16.msra.mxu0 0
        %658 = vmatprep.subr.bf16.mxu0 0
        %659 = vmatpush2.bf16.msra.mxu0 0
        %660 = vmatprep.subr.bf16.mxu0 0
        %661 = vmatpush2.bf16.msra.mxu0 0
        %662 = vmatprep.subr.bf16.mxu0 0
        %663 = vmatpush2.bf16.msra.mxu0 0
        %664 = vmatprep.subr.bf16.mxu0 0
        %665 = vmatpush2.bf16.msra.mxu0 0
        %666 = vmatprep.subr.bf16.mxu0 0
        %667 = vmatpush2.bf16.msra.mxu0 0
        %668 = vmatprep.mubr.bf16.mxu0 0
        %669 = vmatmul.mubr.bf16.gmra.mxu0 %v634
        %v670 = vpop.f32.mrf.mxu0
        %v671 = vadd.f32 %v619, %v670
        %v672 = vpop.f32.mrf.mxu0
        %v673 = vpop.f32.mrf.mxu0
        %v674 = vpop.f32.mrf.mxu0
        %675 = vdwg.mxu0
        %v676 = vpack.c.bf16 %v605, %v605
        %v677 = vpack.c.bf16 %v671, %v671
        %v678 = vld [vmem:[#allocation10] sm:$0xf]
        %v679 = vld [vmem:[#allocation10 + $0x4] sm:$0xf]
        %v680 = vld [vmem:[#allocation10 + $0x8] sm:$0xf]
        %v681 = vld [vmem:[#allocation10 + $0xc] sm:$0xf]
        %vm682 = vcmask 64512
        %v684 = vsel %vm682, %v676, 0
        %v687 = vsel %vm682, %v677, 0
        %689 = vmatprep.subr.bf16.mxu0 0
        %690 = vmatpush1.bf16.xpose.msra.mxu0 0
        %691 = vmatprep.subr.bf16.mxu0 0
        %692 = vmatpush1.bf16.xpose.msra.mxu0 0
        %693 = vmatprep.subr.bf16.mxu0 0
        %694 = vmatpush1.bf16.xpose.msra.mxu0 0
        %695 = vmatprep.subr.bf16.mxu0 0
        %696 = vmatpush1.bf16.xpose.msra.mxu0 0
        %697 = vmatprep.subr.bf16.mxu0 0
        %698 = vmatpush1.bf16.xpose.msra.mxu0 0
        %699 = vmatprep.subr.bf16.mxu0 0
        %700 = vmatpush1.bf16.xpose.msra.mxu0 0
        %701 = vmatprep.subr.bf16.mxu0 0
        %702 = vmatpush1.bf16.xpose.msra.mxu0 0
        %703 = vmatprep.subr.bf16.mxu0 0
        %704 = vmatpush1.bf16.xpose.msra.mxu0 %v687
        %705 = vmatprep.subr.bf16.mxu0 0
        %706 = vmatpush2.bf16.xpose.msra.mxu0 0
        %707 = vmatprep.subr.bf16.mxu0 0
        %708 = vmatpush2.bf16.xpose.msra.mxu0 0
        %709 = vmatprep.subr.bf16.mxu0 0
        %710 = vmatpush2.bf16.xpose.msra.mxu0 0
        %711 = vmatprep.subr.bf16.mxu0 0
        %712 = vmatpush2.bf16.xpose.msra.mxu0 0
        %713 = vmatprep.subr.bf16.mxu0 0
        %714 = vmatpush2.bf16.xpose.msra.mxu0 0
        %715 = vmatprep.subr.bf16.mxu0 0
        %716 = vmatpush2.bf16.xpose.msra.mxu0 0
        %717 = vmatprep.subr.bf16.mxu0 0
        %718 = vmatpush2.bf16.xpose.msra.mxu0 0
        %719 = vmatprep.subr.bf16.mxu0 0
        %720 = vmatpush2.bf16.xpose.msra.mxu0 0
        %721 = vmatprep.mubr.bf16.mxu0 0
        %722 = vmatmul.mubr.bf16.gmra.mxu0 %v684
        %v723 = vpop.f32.mrf.mxu0
        %v724 = vadd.f32 0.0, %v723
        %v725 = vpop.f32.mrf.mxu0
        %v726 = vpop.f32.mrf.mxu0
        %v727 = vpop.f32.mrf.mxu0
        %728 = vdwg.mxu0
        %v729 = vmul.f32 %v724, 0.35355338
        %v730 = vadd.f32 %v729, %v540
        %v731 = vsel %vm682, %v730, -inf
        %732 = vmax.xlane.f32.xlu0 %v731
        %v733 = vpop.xlane.xlu0 %732
        %v734 = vsub.f32 %v730, %v733
        %v735 = vmul.f32 %v734, 1.442695
        %v736 = vpow.pop %v735
        %v737 = vsel %vm682, %v736, 0.0
        %738 = vadd.xlane.f32.xlu0 %v737
        %v739 = vpop.xlane.xlu0 %738
        %v740 = vrcp.pop %v739
        %v741 = vmul.f32 %v736, %v740
        %v742 = vpack.c.bf16 %v741, %v741
        %744 = vrot.lane.b32.xlu0 %v677, 96
        %v745 = vpop.permute.xlu0 %744
        %v747 = vsel %vm682, %v742, 0
        %vm749 = vcmask 1043456
        %v751 = vsel %vm749, %v745, 0
        %753 = vmatprep.subr.bf16.mxu0 0
        %754 = vmatpush1.bf16.msra.mxu0 0
        %755 = vmatprep.subr.bf16.mxu0 0
        %756 = vmatpush1.bf16.msra.mxu0 0
        %757 = vmatprep.subr.bf16.mxu0 0
        %758 = vmatpush1.bf16.msra.mxu0 0
        %759 = vmatprep.subr.bf16.mxu0 0
        %760 = vmatpush1.bf16.msra.mxu0 0
        %761 = vmatprep.subr.bf16.mxu0 0
        %762 = vmatpush1.bf16.msra.mxu0 0
        %763 = vmatprep.subr.bf16.mxu0 0
        %764 = vmatpush1.bf16.msra.mxu0 0
        %765 = vmatprep.subr.bf16.mxu0 0
        %766 = vmatpush1.bf16.msra.mxu0 0
        %767 = vmatprep.subr.bf16.mxu0 0
        %768 = vmatpush1.bf16.msra.mxu0 %v751
        %769 = vmatprep.subr.bf16.mxu0 0
        %770 = vmatpush2.bf16.msra.mxu0 0
        %771 = vmatprep.subr.bf16.mxu0 0
        %772 = vmatpush2.bf16.msra.mxu0 0
        %773 = vmatprep.subr.bf16.mxu0 0
        %774 = vmatpush2.bf16.msra.mxu0 0
        %775 = vmatprep.subr.bf16.mxu0 0
        %776 = vmatpush2.bf16.msra.mxu0 0
        %777 = vmatprep.subr.bf16.mxu0 0
        %778 = vmatpush2.bf16.msra.mxu0 0
        %779 = vmatprep.subr.bf16.mxu0 0
        %780 = vmatpush2.bf16.msra.mxu0 0
        %781 = vmatprep.subr.bf16.mxu0 0
        %782 = vmatpush2.bf16.msra.mxu0 0
        %783 = vmatprep.subr.bf16.mxu0 0
        %784 = vmatpush2.bf16.msra.mxu0 0
        %785 = vmatprep.mubr.bf16.mxu0 0
        %786 = vmatmul.mubr.bf16.gmra.mxu0 %v747
        %v787 = vpop.f32.mrf.mxu0
        %v788 = vadd.f32 0.0, %v787
        %v789 = vpop.f32.mrf.mxu0
        %v790 = vpop.f32.mrf.mxu0
        %v791 = vpop.f32.mrf.mxu0
        %792 = vdwg.mxu0
        %v793 = vpack.c.bf16 %v788, %v788
        %795 = vrot.lane.b32.xlu0 %v676, 120
        %v796 = vpop.permute.xlu0 %795
        %797 = vrot.lane.b32.xlu0 %v677, 120
        %v798 = vpop.permute.xlu0 %797
        %v800 = vsel %vm682, %v796, 0
        %v803 = vsel %vm682, %v798, 0
        %805 = vmatprep.subr.bf16.mxu0 0
        %806 = vmatpush1.bf16.xpose.msra.mxu0 0
        %807 = vmatprep.subr.bf16.mxu0 0
        %808 = vmatpush1.bf16.xpose.msra.mxu0 0
        %809 = vmatprep.subr.bf16.mxu0 0
        %810 = vmatpush1.bf16.xpose.msra.mxu0 0
        %811 = vmatprep.subr.bf16.mxu0 0
        %812 = vmatpush1.bf16.xpose.msra.mxu0 0
        %813 = vmatprep.subr.bf16.mxu0 0
        %814 = vmatpush1.bf16.xpose.msra.mxu0 0
        %815 = vmatprep.subr.bf16.mxu0 0
        %816 = vmatpush1.bf16.xpose.msra.mxu0 0
        %817 = vmatprep.subr.bf16.mxu0 0
        %818 = vmatpush1.bf16.xpose.msra.mxu0 0
        %819 = vmatprep.subr.bf16.mxu0 0
        %820 = vmatpush1.bf16.xpose.msra.mxu0 %v803
        %821 = vmatprep.subr.bf16.mxu0 0
        %822 = vmatpush2.bf16.xpose.msra.mxu0 0
        %823 = vmatprep.subr.bf16.mxu0 0
        %824 = vmatpush2.bf16.xpose.msra.mxu0 0
        %825 = vmatprep.subr.bf16.mxu0 0
        %826 = vmatpush2.bf16.xpose.msra.mxu0 0
        %827 = vmatprep.subr.bf16.mxu0 0
        %828 = vmatpush2.bf16.xpose.msra.mxu0 0
        %829 = vmatprep.subr.bf16.mxu0 0
        %830 = vmatpush2.bf16.xpose.msra.mxu0 0
        %831 = vmatprep.subr.bf16.mxu0 0
        %832 = vmatpush2.bf16.xpose.msra.mxu0 0
        %833 = vmatprep.subr.bf16.mxu0 0
        %834 = vmatpush2.bf16.xpose.msra.mxu0 0
        %835 = vmatprep.subr.bf16.mxu0 0
        %836 = vmatpush2.bf16.xpose.msra.mxu0 0
        %837 = vmatprep.mubr.bf16.mxu0 0
        %838 = vmatmul.mubr.bf16.gmra.mxu0 %v800
        %v839 = vpop.f32.mrf.mxu0
        %v840 = vadd.f32 0.0, %v839
        %v841 = vpop.f32.mrf.mxu0
        %v842 = vpop.f32.mrf.mxu0
        %v843 = vpop.f32.mrf.mxu0
        %844 = vdwg.mxu0
        %v845 = vmul.f32 %v840, 0.35355338
        %v846 = vadd.f32 %v845, %v540
        %v847 = vsel %vm682, %v846, -inf
        %848 = vmax.xlane.f32.xlu0 %v847
        %v849 = vpop.xlane.xlu0 %848
        %v850 = vsub.f32 %v846, %v849
        %v851 = vmul.f32 %v850, 1.442695
        %v852 = vpow.pop %v851
        %v853 = vsel %vm682, %v852, 0.0
        %854 = vadd.xlane.f32.xlu0 %v853
        %v855 = vpop.xlane.xlu0 %854
        %v856 = vrcp.pop %v855
        %v857 = vmul.f32 %v852, %v856
        %v858 = vpack.c.bf16 %v857, %v857
        %859 = vrot.lane.b32.xlu0 %v677, 88
        %v860 = vpop.permute.xlu0 %859
        %v862 = vsel %vm682, %v858, 0
        %v865 = vsel %vm749, %v860, 0
        %867 = vmatprep.subr.bf16.mxu0 0
        %868 = vmatpush1.bf16.msra.mxu0 0
        %869 = vmatprep.subr.bf16.mxu0 0
        %870 = vmatpush1.bf16.msra.mxu0 0
        %871 = vmatprep.subr.bf16.mxu0 0
        %872 = vmatpush1.bf16.msra.mxu0 0
        %873 = vmatprep.subr.bf16.mxu0 0
        %874 = vmatpush1.bf16.msra.mxu0 0
        %875 = vmatprep.subr.bf16.mxu0 0
        %876 = vmatpush1.bf16.msra.mxu0 0
        %877 = vmatprep.subr.bf16.mxu0 0
        %878 = vmatpush1.bf16.msra.mxu0 0
        %879 = vmatprep.subr.bf16.mxu0 0
        %880 = vmatpush1.bf16.msra.mxu0 0
        %881 = vmatprep.subr.bf16.mxu0 0
        %882 = vmatpush1.bf16.msra.mxu0 %v865
        %883 = vmatprep.subr.bf16.mxu0 0
        %884 = vmatpush2.bf16.msra.mxu0 0
        %885 = vmatprep.subr.bf16.mxu0 0
        %886 = vmatpush2.bf16.msra.mxu0 0
        %887 = vmatprep.subr.bf16.mxu0 0
        %888 = vmatpush2.bf16.msra.mxu0 0
        %889 = vmatprep.subr.bf16.mxu0 0
        %890 = vmatpush2.bf16.msra.mxu0 0
        %891 = vmatprep.subr.bf16.mxu0 0
        %892 = vmatpush2.bf16.msra.mxu0 0
        %893 = vmatprep.subr.bf16.mxu0 0
        %894 = vmatpush2.bf16.msra.mxu0 0
        %895 = vmatprep.subr.bf16.mxu0 0
        %896 = vmatpush2.bf16.msra.mxu0 0
        %897 = vmatprep.subr.bf16.mxu0 0
        %898 = vmatpush2.bf16.msra.mxu0 0
        %899 = vmatprep.mubr.bf16.mxu0 0
        %900 = vmatmul.mubr.bf16.gmra.mxu0 %v862
        %v901 = vpop.f32.mrf.mxu0
        %v902 = vadd.f32 0.0, %v901
        %v903 = vpop.f32.mrf.mxu0
        %v904 = vpop.f32.mrf.mxu0
        %v905 = vpop.f32.mrf.mxu0
        %906 = vdwg.mxu0
        %v907 = vpack.c.bf16 %v902, %v902
        %v909 = vsel %vm682, %v907, 0
        %v912 = vsel %vm749, %v679, 0
        %914 = vmatprep.subr.bf16.mxu0 0
        %915 = vmatpush1.bf16.msra.mxu0 0
        %916 = vmatprep.subr.bf16.mxu0 0
        %917 = vmatpush1.bf16.msra.mxu0 0
        %918 = vmatprep.subr.bf16.mxu0 0
        %919 = vmatpush1.bf16.msra.mxu0 0
        %920 = vmatprep.subr.bf16.mxu0 0
        %921 = vmatpush1.bf16.msra.mxu0 0
        %922 = vmatprep.subr.bf16.mxu0 0
        %923 = vmatpush1.bf16.msra.mxu0 0
        %924 = vmatprep.subr.bf16.mxu0 0
        %925 = vmatpush1.bf16.msra.mxu0 0
        %926 = vmatprep.subr.bf16.mxu0 0
        %927 = vmatpush1.bf16.msra.mxu0 0
        %928 = vmatprep.subr.bf16.mxu0 0
        %929 = vmatpush1.bf16.msra.mxu0 %v912
        %930 = vmatprep.subr.bf16.mxu0 0
        %931 = vmatpush2.bf16.msra.mxu0 0
        %932 = vmatprep.subr.bf16.mxu0 0
        %933 = vmatpush2.bf16.msra.mxu0 0
        %934 = vmatprep.subr.bf16.mxu0 0
        %935 = vmatpush2.bf16.msra.mxu0 0
        %936 = vmatprep.subr.bf16.mxu0 0
        %937 = vmatpush2.bf16.msra.mxu0 0
        %938 = vmatprep.subr.bf16.mxu0 0
        %939 = vmatpush2.bf16.msra.mxu0 0
        %940 = vmatprep.subr.bf16.mxu0 0
        %941 = vmatpush2.bf16.msra.mxu0 0
        %942 = vmatprep.subr.bf16.mxu0 0
        %943 = vmatpush2.bf16.msra.mxu0 0
        %944 = vmatprep.subr.bf16.mxu0 0
        %945 = vmatpush2.bf16.msra.mxu0 0
        %946 = vmatprep.mubr.bf16.mxu0 0
        %947 = vmatmul.mubr.bf16.gmra.mxu0 %v909
        %v948 = vpop.f32.mrf.mxu0
        %v949 = vadd.f32 0.0, %v948
        %v950 = vpop.f32.mrf.mxu0
        %v951 = vpop.f32.mrf.mxu0
        %v952 = vpop.f32.mrf.mxu0
        %953 = vdwg.mxu0
        %v955 = vsel %vm682, %v793, 0
        %v958 = vsel %vm749, %v678, 0
        %960 = vmatprep.subr.bf16.mxu0 0
        %961 = vmatpush1.bf16.msra.mxu0 0
        %962 = vmatprep.subr.bf16.mxu0 0
        %963 = vmatpush1.bf16.msra.mxu0 0
        %964 = vmatprep.subr.bf16.mxu0 0
        %965 = vmatpush1.bf16.msra.mxu0 0
        %966 = vmatprep.subr.bf16.mxu0 0
        %967 = vmatpush1.bf16.msra.mxu0 0
        %968 = vmatprep.subr.bf16.mxu0 0
        %969 = vmatpush1.bf16.msra.mxu0 0
        %970 = vmatprep.subr.bf16.mxu0 0
        %971 = vmatpush1.bf16.msra.mxu0 0
        %972 = vmatprep.subr.bf16.mxu0 0
        %973 = vmatpush1.bf16.msra.mxu0 0
        %974 = vmatprep.subr.bf16.mxu0 0
        %975 = vmatpush1.bf16.msra.mxu0 %v958
        %976 = vmatprep.subr.bf16.mxu0 0
        %977 = vmatpush2.bf16.msra.mxu0 0
        %978 = vmatprep.subr.bf16.mxu0 0
        %979 = vmatpush2.bf16.msra.mxu0 0
        %980 = vmatprep.subr.bf16.mxu0 0
        %981 = vmatpush2.bf16.msra.mxu0 0
        %982 = vmatprep.subr.bf16.mxu0 0
        %983 = vmatpush2.bf16.msra.mxu0 0
        %984 = vmatprep.subr.bf16.mxu0 0
        %985 = vmatpush2.bf16.msra.mxu0 0
        %986 = vmatprep.subr.bf16.mxu0 0
        %987 = vmatpush2.bf16.msra.mxu0 0
        %988 = vmatprep.subr.bf16.mxu0 0
        %989 = vmatpush2.bf16.msra.mxu0 0
        %990 = vmatprep.subr.bf16.mxu0 0
        %991 = vmatpush2.bf16.msra.mxu0 0
        %992 = vmatprep.mubr.bf16.mxu0 0
        %993 = vmatmul.mubr.bf16.gmra.mxu0 %v955
        %v994 = vpop.f32.mrf.mxu0
        %v995 = vadd.f32 %v949, %v994
        %v996 = vpop.f32.mrf.mxu0
        %v997 = vpop.f32.mrf.mxu0
        %v998 = vpop.f32.mrf.mxu0
        %999 = vdwg.mxu0
        %1000 = vrot.lane.b32.xlu0 %v676, 112
        %v1001 = vpop.permute.xlu0 %1000
        %1002 = vrot.lane.b32.xlu0 %v677, 112
        %v1003 = vpop.permute.xlu0 %1002
        %v1005 = vsel %vm682, %v1001, 0
        %v1008 = vsel %vm682, %v1003, 0
        %1010 = vmatprep.subr.bf16.mxu0 0
        %1011 = vmatpush1.bf16.xpose.msra.mxu0 0
        %1012 = vmatprep.subr.bf16.mxu0 0
        %1013 = vmatpush1.bf16.xpose.msra.mxu0 0
        %1014 = vmatprep.subr.bf16.mxu0 0
        %1015 = vmatpush1.bf16.xpose.msra.mxu0 0
        %1016 = vmatprep.subr.bf16.mxu0 0
        %1017 = vmatpush1.bf16.xpose.msra.mxu0 0
        %1018 = vmatprep.subr.bf16.mxu0 0
        %1019 = vmatpush1.bf16.xpose.msra.mxu0 0
        %1020 = vmatprep.subr.bf16.mxu0 0
        %1021 = vmatpush1.bf16.xpose.msra.mxu0 0
        %1022 = vmatprep.subr.bf16.mxu0 0
        %1023 = vmatpush1.bf16.xpose.msra.mxu0 0
        %1024 = vmatprep.subr.bf16.mxu0 0
        %1025 = vmatpush1.bf16.xpose.msra.mxu0 %v1008
        %1026 = vmatprep.subr.bf16.mxu0 0
        %1027 = vmatpush2.bf16.xpose.msra.mxu0 0
        %1028 = vmatprep.subr.bf16.mxu0 0
        %1029 = vmatpush2.bf16.xpose.msra.mxu0 0
        %1030 = vmatprep.subr.bf16.mxu0 0
        %1031 = vmatpush2.bf16.xpose.msra.mxu0 0
        %1032 = vmatprep.subr.bf16.mxu0 0
        %1033 = vmatpush2.bf16.xpose.msra.mxu0 0
        %1034 = vmatprep.subr.bf16.mxu0 0
        %1035 = vmatpush2.bf16.xpose.msra.mxu0 0
        %1036 = vmatprep.subr.bf16.mxu0 0
        %1037 = vmatpush2.bf16.xpose.msra.mxu0 0
        %1038 = vmatprep.subr.bf16.mxu0 0
        %1039 = vmatpush2.bf16.xpose.msra.mxu0 0
        %1040 = vmatprep.subr.bf16.mxu0 0
        %1041 = vmatpush2.bf16.xpose.msra.mxu0 0
        %1042 = vmatprep.mubr.bf16.mxu0 0
        %1043 = vmatmul.mubr.bf16.gmra.mxu0 %v1005
        %v1044 = vpop.f32.mrf.mxu0
        %v1045 = vadd.f32 0.0, %v1044
        %v1046 = vpop.f32.mrf.mxu0
        %v1047 = vpop.f32.mrf.mxu0
        %v1048 = vpop.f32.mrf.mxu0
        %1049 = vdwg.mxu0
        %v1050 = vmul.f32 %v1045, 0.35355338
        %v1051 = vadd.f32 %v1050, %v540
        %v1052 = vsel %vm682, %v1051, -inf
        %1053 = vmax.xlane.f32.xlu0 %v1052
        %v1054 = vpop.xlane.xlu0 %1053
        %v1055 = vsub.f32 %v1051, %v1054
        %v1056 = vmul.f32 %v1055, 1.442695
        %v1057 = vpow.pop %v1056
        %v1058 = vsel %vm682, %v1057, 0.0
        %1059 = vadd.xlane.f32.xlu0 %v1058
        %v1060 = vpop.xlane.xlu0 %1059
        %v1061 = vrcp.pop %v1060
        %v1062 = vmul.f32 %v1057, %v1061
        %v1063 = vpack.c.bf16 %v1062, %v1062
        %1064 = vrot.lane.b32.xlu0 %v677, 80
        %v1065 = vpop.permute.xlu0 %1064
        %v1067 = vsel %vm682, %v1063, 0
        %v1070 = vsel %vm749, %v1065, 0
        %1072 = vmatprep.subr.bf16.mxu0 0
        %1073 = vmatpush1.bf16.msra.mxu0 0
        %1074 = vmatprep.subr.bf16.mxu0 0
        %1075 = vmatpush1.bf16.msra.mxu0 0
        %1076 = vmatprep.subr.bf16.mxu0 0
        %1077 = vmatpush1.bf16.msra.mxu0 0
        %1078 = vmatprep.subr.bf16.mxu0 0
        %1079 = vmatpush1.bf16.msra.mxu0 0
        %1080 = vmatprep.subr.bf16.mxu0 0
        %1081 = vmatpush1.bf16.msra.mxu0 0
        %1082 = vmatprep.subr.bf16.mxu0 0
        %1083 = vmatpush1.bf16.msra.mxu0 0
        %1084 = vmatprep.subr.bf16.mxu0 0
        %1085 = vmatpush1.bf16.msra.mxu0 0
        %1086 = vmatprep.subr.bf16.mxu0 0
        %1087 = vmatpush1.bf16.msra.mxu0 %v1070
        %1088 = vmatprep.subr.bf16.mxu0 0
        %1089 = vmatpush2.bf16.msra.mxu0 0
        %1090 = vmatprep.subr.bf16.mxu0 0
        %1091 = vmatpush2.bf16.msra.mxu0 0
        %1092 = vmatprep.subr.bf16.mxu0 0
        %1093 = vmatpush2.bf16.msra.mxu0 0
        %1094 = vmatprep.subr.bf16.mxu0 0
        %1095 = vmatpush2.bf16.msra.mxu0 0
        %1096 = vmatprep.subr.bf16.mxu0 0
        %1097 = vmatpush2.bf16.msra.mxu0 0
        %1098 = vmatprep.subr.bf16.mxu0 0
        %1099 = vmatpush2.bf16.msra.mxu0 0
        %1100 = vmatprep.subr.bf16.mxu0 0
        %1101 = vmatpush2.bf16.msra.mxu0 0
        %1102 = vmatprep.subr.bf16.mxu0 0
        %1103 = vmatpush2.bf16.msra.mxu0 0
        %1104 = vmatprep.mubr.bf16.mxu0 0
        %1105 = vmatmul.mubr.bf16.gmra.mxu0 %v1067
        %v1106 = vpop.f32.mrf.mxu0
        %v1107 = vadd.f32 0.0, %v1106
        %v1108 = vpop.f32.mrf.mxu0
        %v1109 = vpop.f32.mrf.mxu0
        %v1110 = vpop.f32.mrf.mxu0
        %1111 = vdwg.mxu0
        %v1112 = vpack.c.bf16 %v1107, %v1107
        %v1114 = vsel %vm682, %v1112, 0
        %v1117 = vsel %vm749, %v680, 0
        %1119 = vmatprep.subr.bf16.mxu0 0
        %1120 = vmatpush1.bf16.msra.mxu0 0
        %1121 = vmatprep.subr.bf16.mxu0 0
        %1122 = vmatpush1.bf16.msra.mxu0 0
        %1123 = vmatprep.subr.bf16.mxu0 0
        %1124 = vmatpush1.bf16.msra.mxu0 0
        %1125 = vmatprep.subr.bf16.mxu0 0
        %1126 = vmatpush1.bf16.msra.mxu0 0
        %1127 = vmatprep.subr.bf16.mxu0 0
        %1128 = vmatpush1.bf16.msra.mxu0 0
        %1129 = vmatprep.subr.bf16.mxu0 0
        %1130 = vmatpush1.bf16.msra.mxu0 0
        %1131 = vmatprep.subr.bf16.mxu0 0
        %1132 = vmatpush1.bf16.msra.mxu0 0
        %1133 = vmatprep.subr.bf16.mxu0 0
        %1134 = vmatpush1.bf16.msra.mxu0 %v1117
        %1135 = vmatprep.subr.bf16.mxu0 0
        %1136 = vmatpush2.bf16.msra.mxu0 0
        %1137 = vmatprep.subr.bf16.mxu0 0
        %1138 = vmatpush2.bf16.msra.mxu0 0
        %1139 = vmatprep.subr.bf16.mxu0 0
        %1140 = vmatpush2.bf16.msra.mxu0 0
        %1141 = vmatprep.subr.bf16.mxu0 0
        %1142 = vmatpush2.bf16.msra.mxu0 0
        %1143 = vmatprep.subr.bf16.mxu0 0
        %1144 = vmatpush2.bf16.msra.mxu0 0
        %1145 = vmatprep.subr.bf16.mxu0 0
        %1146 = vmatpush2.bf16.msra.mxu0 0
        %1147 = vmatprep.subr.bf16.mxu0 0
        %1148 = vmatpush2.bf16.msra.mxu0 0
        %1149 = vmatprep.subr.bf16.mxu0 0
        %1150 = vmatpush2.bf16.msra.mxu0 0
        %1151 = vmatprep.mubr.bf16.mxu0 0
        %1152 = vmatmul.mubr.bf16.gmra.mxu0 %v1114
        %v1153 = vpop.f32.mrf.mxu0
        %v1154 = vadd.f32 0.0, %v1153
        %v1155 = vpop.f32.mrf.mxu0
        %v1156 = vpop.f32.mrf.mxu0
        %v1157 = vpop.f32.mrf.mxu0
        %1158 = vdwg.mxu0
        %v1159 = vadd.f32 %v995, %v1154
        %1160 = vrot.lane.b32.xlu0 %v676, 104
        %v1161 = vpop.permute.xlu0 %1160
        %1162 = vrot.lane.b32.xlu0 %v677, 104
        %v1163 = vpop.permute.xlu0 %1162
        %v1165 = vsel %vm682, %v1161, 0
        %v1168 = vsel %vm682, %v1163, 0
        %1170 = vmatprep.subr.bf16.mxu0 0
        %1171 = vmatpush1.bf16.xpose.msra.mxu0 0
        %1172 = vmatprep.subr.bf16.mxu0 0
        %1173 = vmatpush1.bf16.xpose.msra.mxu0 0
        %1174 = vmatprep.subr.bf16.mxu0 0
        %1175 = vmatpush1.bf16.xpose.msra.mxu0 0
        %1176 = vmatprep.subr.bf16.mxu0 0
        %1177 = vmatpush1.bf16.xpose.msra.mxu0 0
        %1178 = vmatprep.subr.bf16.mxu0 0
        %1179 = vmatpush1.bf16.xpose.msra.mxu0 0
        %1180 = vmatprep.subr.bf16.mxu0 0
        %1181 = vmatpush1.bf16.xpose.msra.mxu0 0
        %1182 = vmatprep.subr.bf16.mxu0 0
        %1183 = vmatpush1.bf16.xpose.msra.mxu0 0
        %1184 = vmatprep.subr.bf16.mxu0 0
        %1185 = vmatpush1.bf16.xpose.msra.mxu0 %v1168
        %1186 = vmatprep.subr.bf16.mxu0 0
        %1187 = vmatpush2.bf16.xpose.msra.mxu0 0
        %1188 = vmatprep.subr.bf16.mxu0 0
        %1189 = vmatpush2.bf16.xpose.msra.mxu0 0
        %1190 = vmatprep.subr.bf16.mxu0 0
        %1191 = vmatpush2.bf16.xpose.msra.mxu0 0
        %1192 = vmatprep.subr.bf16.mxu0 0
        %1193 = vmatpush2.bf16.xpose.msra.mxu0 0
        %1194 = vmatprep.subr.bf16.mxu0 0
        %1195 = vmatpush2.bf16.xpose.msra.mxu0 0
        %1196 = vmatprep.subr.bf16.mxu0 0
        %1197 = vmatpush2.bf16.xpose.msra.mxu0 0
        %1198 = vmatprep.subr.bf16.mxu0 0
        %1199 = vmatpush2.bf16.xpose.msra.mxu0 0
        %1200 = vmatprep.subr.bf16.mxu0 0
        %1201 = vmatpush2.bf16.xpose.msra.mxu0 0
        %1202 = vmatprep.mubr.bf16.mxu0 0
        %1203 = vmatmul.mubr.bf16.gmra.mxu0 %v1165
        %v1204 = vpop.f32.mrf.mxu0
        %v1205 = vadd.f32 0.0, %v1204
        %v1206 = vpop.f32.mrf.mxu0
        %v1207 = vpop.f32.mrf.mxu0
        %v1208 = vpop.f32.mrf.mxu0
        %1209 = vdwg.mxu0
        %v1210 = vmul.f32 %v1205, 0.35355338
        %v1211 = vadd.f32 %v1210, %v540
        %v1212 = vsel %vm682, %v1211, -inf
        %1213 = vmax.xlane.f32.xlu0 %v1212
        %v1214 = vpop.xlane.xlu0 %1213
        %v1215 = vsub.f32 %v1211, %v1214
        %v1216 = vmul.f32 %v1215, 1.442695
        %v1217 = vpow.pop %v1216
        %v1218 = vsel %vm682, %v1217, 0.0
        %1219 = vadd.xlane.f32.xlu0 %v1218
        %v1220 = vpop.xlane.xlu0 %1219
        %v1221 = vrcp.pop %v1220
        %v1222 = vmul.f32 %v1217, %v1221
        %v1223 = vpack.c.bf16 %v1222, %v1222
        %1224 = vrot.lane.b32.xlu0 %v677, 72
        %v1225 = vpop.permute.xlu0 %1224
        %v1227 = vsel %vm682, %v1223, 0
        %v1230 = vsel %vm749, %v1225, 0
        %1232 = vmatprep.subr.bf16.mxu0 0
        %1233 = vmatpush1.bf16.msra.mxu0 0
        %1234 = vmatprep.subr.bf16.mxu0 0
        %1235 = vmatpush1.bf16.msra.mxu0 0
        %1236 = vmatprep.subr.bf16.mxu0 0
        %1237 = vmatpush1.bf16.msra.mxu0 0
        %1238 = vmatprep.subr.bf16.mxu0 0
        %1239 = vmatpush1.bf16.msra.mxu0 0
        %1240 = vmatprep.subr.bf16.mxu0 0
        %1241 = vmatpush1.bf16.msra.mxu0 0
        %1242 = vmatprep.subr.bf16.mxu0 0
        %1243 = vmatpush1.bf16.msra.mxu0 0
        %1244 = vmatprep.subr.bf16.mxu0 0
        %1245 = vmatpush1.bf16.msra.mxu0 0
        %1246 = vmatprep.subr.bf16.mxu0 0
        %1247 = vmatpush1.bf16.msra.mxu0 %v1230
        %1248 = vmatprep.subr.bf16.mxu0 0
        %1249 = vmatpush2.bf16.msra.mxu0 0
        %1250 = vmatprep.subr.bf16.mxu0 0
        %1251 = vmatpush2.bf16.msra.mxu0 0
        %1252 = vmatprep.subr.bf16.mxu0 0
        %1253 = vmatpush2.bf16.msra.mxu0 0
        %1254 = vmatprep.subr.bf16.mxu0 0
        %1255 = vmatpush2.bf16.msra.mxu0 0
        %1256 = vmatprep.subr.bf16.mxu0 0
        %1257 = vmatpush2.bf16.msra.mxu0 0
        %1258 = vmatprep.subr.bf16.mxu0 0
        %1259 = vmatpush2.bf16.msra.mxu0 0
        %1260 = vmatprep.subr.bf16.mxu0 0
        %1261 = vmatpush2.bf16.msra.mxu0 0
        %1262 = vmatprep.subr.bf16.mxu0 0
        %1263 = vmatpush2.bf16.msra.mxu0 0
        %1264 = vmatprep.mubr.bf16.mxu0 0
        %1265 = vmatmul.mubr.bf16.gmra.mxu0 %v1227
        %v1266 = vpop.f32.mrf.mxu0
        %v1267 = vadd.f32 0.0, %v1266
        %v1268 = vpop.f32.mrf.mxu0
        %v1269 = vpop.f32.mrf.mxu0
        %v1270 = vpop.f32.mrf.mxu0
        %1271 = vdwg.mxu0
        %v1272 = vpack.c.bf16 %v1267, %v1267
        %v1274 = vsel %vm682, %v1272, 0
        %v1277 = vsel %vm749, %v681, 0
        %1279 = vmatprep.subr.bf16.mxu0 0
        %1280 = vmatpush1.bf16.msra.mxu0 0
        %1281 = vmatprep.subr.bf16.mxu0 0
        %1282 = vmatpush1.bf16.msra.mxu0 0
        %1283 = vmatprep.subr.bf16.mxu0 0
        %1284 = vmatpush1.bf16.msra.mxu0 0
        %1285 = vmatprep.subr.bf16.mxu0 0
        %1286 = vmatpush1.bf16.msra.mxu0 0
        %1287 = vmatprep.subr.bf16.mxu0 0
        %1288 = vmatpush1.bf16.msra.mxu0 0
        %1289 = vmatprep.subr.bf16.mxu0 0
        %1290 = vmatpush1.bf16.msra.mxu0 0
        %1291 = vmatprep.subr.bf16.mxu0 0
        %1292 = vmatpush1.bf16.msra.mxu0 0
        %1293 = vmatprep.subr.bf16.mxu0 0
        %1294 = vmatpush1.bf16.msra.mxu0 %v1277
        %1295 = vmatprep.subr.bf16.mxu0 0
        %1296 = vmatpush2.bf16.msra.mxu0 0
        %1297 = vmatprep.subr.bf16.mxu0 0
        %1298 = vmatpush2.bf16.msra.mxu0 0
        %1299 = vmatprep.subr.bf16.mxu0 0
        %1300 = vmatpush2.bf16.msra.mxu0 0
        %1301 = vmatprep.subr.bf16.mxu0 0
        %1302 = vmatpush2.bf16.msra.mxu0 0
        %1303 = vmatprep.subr.bf16.mxu0 0
        %1304 = vmatpush2.bf16.msra.mxu0 0
        %1305 = vmatprep.subr.bf16.mxu0 0
        %1306 = vmatpush2.bf16.msra.mxu0 0
        %1307 = vmatprep.subr.bf16.mxu0 0
        %1308 = vmatpush2.bf16.msra.mxu0 0
        %1309 = vmatprep.subr.bf16.mxu0 0
        %1310 = vmatpush2.bf16.msra.mxu0 0
        %1311 = vmatprep.mubr.bf16.mxu0 0
        %1312 = vmatmul.mubr.bf16.gmra.mxu0 %v1274
        %v1313 = vpop.f32.mrf.mxu0
        %v1314 = vadd.f32 0.0, %v1313
        %v1315 = vpop.f32.mrf.mxu0
        %v1316 = vpop.f32.mrf.mxu0
        %v1317 = vpop.f32.mrf.mxu0
        %1318 = vdwg.mxu0
        %v1319 = vadd.f32 %v1159, %v1314
        %v1320 = vld [vmem:[#allocation11] sm:$0x1]
        %v1322 = vlaneseq
        %v1323 = vshrl.u32 %v1322, 7
        %v1324 = vsub.s32 0, %v1323
        %v1325 = vrot.slane %v1320, %v1324
        %v1327 = vadd.f32 %v1319, %v1325
        %v1328 = vadd.f32 %v1327, %v538
        %v1329 = vld [vmem:[#allocation13] sm:$0x1]
        %v1330 = vld [vmem:[#allocation14] sm:$0x1]
        %v1331 = vsel %vm566, %v1328, 0.0
        %1332 = vadd.xlane.f32.xlu0 %v1331
        %v1333 = vpop.xlane.xlu0 %1332
        %v1334 = vrcp.pop 32.0
        %v1335 = vmul.f32 %v1333, %v1334
        %v1336 = vsub.f32 %v1328, %v1335
        %v1337 = vmul.f32 %v1336, %v1336
        %v1338 = vsel %vm566, %v1337, 0.0
        %1339 = vadd.xlane.f32.xlu0 %v1338
        %v1340 = vpop.xlane.xlu0 %1339
        %v1341 = vmul.f32 %v1340, %v1334
        %v1342 = vadd.f32 %v1341, 1e-05
        %v1343 = vrsqrt.pop %v1342
        %v1344 = vmul.f32 %v1336, %v1343
        %v1346 = vlaneseq
        %v1347 = vshrl.u32 %v1346, 7
        %v1348 = vsub.s32 0, %v1347
        %v1349 = vrot.slane %v1329, %v1348
        %v1351 = vmul.f32 %v1344, %v1349
        %v1353 = vlaneseq
        %v1354 = vshrl.u32 %v1353, 7
        %v1355 = vsub.s32 0, %v1354
        %v1356 = vrot.slane %v1330, %v1355
        %v1358 = vadd.f32 %v1351, %v1356
        %1359 = vst.msk [vmem:[%s532] sm:$0xff] %vm566, %v1358
        %s1360 = sand.u32 %s288, 1
        %s1361 = scalar_lea.sflag [#allocation4], %s1360
        %s1362 = sand.u32 %s288, 1
        %s1363 = smul.addr %s1362, 8
        %s1364 = scalar_lea.vmem [#allocation16], %s1363
        // Predicated region
        $region97: #{tpu_custom_call.1} parent=63 // pred_check
          %p1365 = pneg %p298
        $region98: #{tpu_custom_call.1} parent=63 // pred_check_branch
          %1367 = sbr.rel (%p1365) target = $region100
        $region99: #{tpu_custom_call.1} parent=63 // pred_region
          %s1369 = ssub.s32 128, 128
          %1370 = vsyncadd %s1361, %s1369
          %s1371 = smul.addr %s34, 128
          %s1372 = scalar_lea.hbm %s11, %s1371
          %s1374 = sshll.u32 %s1364, 4
          %s1375 = int_to_ptr.vmem [resolvable:$true] %s1374
          %1377 = dma.vmem_to_hbm [thread:$0]  %s1375, 128, %s1372, %s1361
        $region100: #{tpu_custom_call.1} parent=63 // pred_fallthru
          _
      $region64: #{tpu_custom_call.1} parent=5 // pred_fallthru
        _
      %p1378 = scmp.le.s32.totalorder 2, %s29
      // Predicated region
      $region101: #{tpu_custom_call.1} parent=5 // pred_check
        %p1379 = pneg %p1378
      $region102: #{tpu_custom_call.1} parent=5 // pred_check_branch
        %1381 = sbr.rel (%p1379) target = $region104
      $region103: #{tpu_custom_call.1} parent=5 // pred_region
        %s1382 = ssub.s32 %s29, 2
        // Predicated region
        $region105: #{tpu_custom_call.1} parent=103 // pred_check
          %p1383 = pneg %p304
        $region106: #{tpu_custom_call.1} parent=103 // pred_check_branch
          %1385 = sbr.rel (%p1383) target = $region108
        $region107: #{tpu_custom_call.1} parent=103 // pred_region
          %s1386 = sand.u32 %s289, 1
          %s1387 = scalar_lea.sflag [#allocation4], %s1386
          %s1388 = sand.u32 %s289, 1
          %s1389 = smul.addr %s1388, 8
          %s1390 = scalar_lea.vmem [#allocation16], %s1389
          %1391 = dma.done %s1387, 128
        $region108: #{tpu_custom_call.1} parent=103 // pred_fallthru
          _
      $region104: #{tpu_custom_call.1} parent=5 // pred_fallthru
        _
    $region6: #{tpu_custom_call.1} parent=1 // loop_footer
      %s33 = sadd.s32 1, %s29
    $region7: #{tpu_custom_call.1} parent=1 // loop_footer_branch
      %28 = sbr.rel target = $region3
    $region8: #{tpu_custom_call.1} parent=1 // loop_exit
      _
    %1392 = vsyncpa [#allocation3], 1
    %s1393 = scalar_lea.sflag [#allocation3], 1
    %1394 = vsyncpa %s1393, 1
    %1395 = vsyncpa [#allocation6], 1
    %s1396 = scalar_lea.sflag [#allocation6], 1
    %1397 = vsyncpa %s1396, 1
    %1398 = vsyncpa [#allocation9], 1
    %1399 = vsyncpa [#allocation12], 1
    %1400 = vsyncpa [#allocation15], 1
    %1401 = vsyncpa [#allocation4], 1
    %s1402 = scalar_lea.sflag [#allocation4], 1
    %1403 = vsyncpa %s1402, 1

</llo_original>
